<compile_context>
chip_gen: v5e
topology: v5e:2x2
jax: 0.10.0
libtpu: 0.0.40
codegen_flags: <defaults>
</compile_context>

<pallas_src>
import math

import jax
import jax.numpy as jnp
from jax.experimental import pallas as pl
from jax.experimental.pallas import tpu as pltpu

NEG_INF = float("-inf")
BF16 = jnp.bfloat16
F32 = jnp.float32


# --------------------------------------------------------------------------
# Pallas kernel: all layers + final FC for one batch element.
# grid = (batch, layer); h_ref (VMEM scratch) holds the running activation.
# --------------------------------------------------------------------------
def _fused_forward_kernel(x_ref,
                          wv_ref, bv_ref, wo_ref, bo_ref,
                          g1_ref, be1_ref,
                          w1_ref, b1_ref, w2_ref, b2_ref,
                          g2_ref, be2_ref,
                          fcw_ref, fcb_ref,
                          o_ref,
                          h_ref):
    layer = pl.program_id(1)

    @pl.when(layer == 0)
    def _():
        h_ref[...] = x_ref[...]                       # seed with embedding

    x = h_ref[...]                                    # (S, D) f32
    x16 = x.astype(BF16)

    def layer_norm(y, g, b):
        mu = jnp.mean(y, axis=-1, keepdims=True)
        var = jnp.mean(jnp.square(y - mu), axis=-1, keepdims=True)
        return (y - mu) * jax.lax.rsqrt(var + 1e-5) * g + b

    # ---- hollow attention (collapsed): ctx == V exactly -------------------
    v = jnp.dot(x16, wv_ref[...], preferred_element_type=F32) + bv_ref[...]
    attn = jnp.dot(v.astype(BF16), wo_ref[...],
                   preferred_element_type=F32) + bo_ref[...]

    x1 = layer_norm(x + attn, g1_ref[...], be1_ref[...])

    # ---- feed-forward ------------------------------------------------------
    h1 = jnp.dot(x1.astype(BF16), w1_ref[...],
                 preferred_element_type=F32) + b1_ref[...]
    h1 = jnp.maximum(h1, 0.0)
    ff = jnp.dot(h1.astype(BF16), w2_ref[...],
                 preferred_element_type=F32) + b2_ref[...]

    x_out = layer_norm(x1 + ff, g2_ref[...], be2_ref[...])
    h_ref[...] = x_out

    # ---- final FC, fused, only on the last layer ---------------------------
    @pl.when(layer == pl.num_programs(1) - 1)
    def _():
        o_ref[...] = jnp.dot(x_out.astype(BF16), fcw_ref[...],
                             preferred_element_type=F32) + fcb_ref[...]


# --------------------------------------------------------------------------
# Wrapper: pallas_call plumbing
# --------------------------------------------------------------------------
def hollow_transformer_pallas(x, params, *, lane_tile=128):
    B, S, D = x.shape
    L = params["wv"].shape[0]
    F = params["w1"].shape[-1]
    V = params["fc_w"].shape[1]

    # Lane-dense FC output: pad vocab to a multiple of 128.
    Vp = ((V + lane_tile - 1) // lane_tile) * lane_tile
    fc_w, fc_b = params["fc_w"], params["fc_b"]
    if Vp != V:
        fc_w = jnp.pad(fc_w, ((0, 0), (0, Vp - V)))
        fc_b = jnp.pad(fc_b, ((0, 0), (0, Vp - V)))
    # TODO(synk): for large output vocabularies, add a vocab-tile grid axis so
    # the (D, Vp) FC weight block stays within the v7x 64 MiB VMEM budget.

    layer_weights = [params["wv"], params["bv"], params["wo"], params["bo"],
                     params["g1"], params["be1"],
                     params["w1"], params["b1"], params["w2"], params["b2"],
                     params["g2"], params["be2"]]

    def layer_spec(arr):
        tail_shape = tuple(arr.shape[1:])
        tail_idx = (0,) * (arr.ndim - 1)
        return pl.BlockSpec((None,) + tail_shape, lambda b, l: (l,) + tail_idx)

    in_specs = ([pl.BlockSpec((None, S, D), lambda b, l: (b, 0, 0))]
                + [layer_spec(w) for w in layer_weights]
                + [pl.BlockSpec((D, Vp), lambda b, l: (0, 0)),
                   pl.BlockSpec((1, Vp), lambda b, l: (0, 0))])

    flops = B * (L * (4 * S * D * D + 4 * S * D * F) + 2 * S * D * Vp)
    transc = B * L * 2 * S                          # rsqrt per LayerNorm row
    bytes_acc = (B * S * D * 4 + B * S * Vp * 4
                 + L * ((2 * D * D + 2 * D * F) * 2 + (5 * D + F) * 4)
                 + D * Vp * 2 + Vp * 4)

    out = pl.pallas_call(
        _fused_forward_kernel,
        out_shape=jax.ShapeDtypeStruct((B, S, Vp), jnp.float32),
        grid=(B, L),
        in_specs=in_specs,
        out_specs=pl.BlockSpec((None, S, Vp), lambda b, l: (b, 0, 0)),
        scratch_shapes=[pltpu.VMEM((S, D), jnp.float32)],
        compiler_params=pltpu.CompilerParams(
            dimension_semantics=("parallel", "arbitrary"),
            vmem_limit_bytes=48 * 1024 * 1024),
        cost_estimate=pl.CostEstimate(flops=flops, transcendentals=transc,
                                      bytes_accessed=bytes_acc),
    )(x, *layer_weights, fc_w, fc_b)
    return out[:, :, :V]


def hollow_transformer_forward(tokens, mask, params, num_heads):
    # `mask` is accepted and discarded, exactly like the PyTorch module.
    # `num_heads` is irrelevant after the hollow collapse (head split/merge of
    # V is an identity reshape); kept for API parity.
    del mask, num_heads
    # Embedding lookup (gather) kept as plain-JAX glue.
    x = jnp.take(params["emb"], tokens, axis=0)        # (B, S, D) f32
    return hollow_transformer_pallas(x, params)


# --------------------------------------------------------------------------
# Deterministic synthetic parameters (PyTorch-style layout; matmul weights
# stored in bf16, biases / LayerNorm params in f32).  wq/wk are created only
# for the full-path reference -- the kernel never touches them.
# --------------------------------------------------------------------------
def init_params(key, num_layers, d_model, ff_hidden_dim,
                input_vocab_size, output_vocab_size):
    L, D, F = num_layers, d_model, ff_hidden_dim

    def nrm(k, shape, scale=0.05, dtype=jnp.float32):
        return (scale * jax.random.normal(k, shape)).astype(dtype)

    ks = jax.random.split(key, 14)
    params = {
        "emb": nrm(ks[0], (input_vocab_size, D), 1.0),
        "wq": nrm(ks[1], (L, D, D), dtype=BF16), "bq": nrm(ks[2], (L, 1, D)),
        "wk": nrm(ks[3], (L, D, D), dtype=BF16), "bk": nrm(ks[4], (L, 1, D)),
        "wv": nrm(ks[5], (L, D, D), dtype=BF16), "bv": nrm(ks[6], (L, 1, D)),
        "wo": nrm(ks[7], (L, D, D), dtype=BF16), "bo": nrm(ks[8], (L, 1, D)),
        "g1": jnp.ones((L, 1, D), jnp.float32),
        "be1": jnp.zeros((L, 1, D), jnp.float32),
        "w1": nrm(ks[9], (L, D, F), dtype=BF16), "b1": nrm(ks[10], (L, 1, F)),
        "w2": nrm(ks[11], (L, F, D), dtype=BF16), "b2": nrm(ks[12], (L, 1, D)),
        "g2": jnp.ones((L, 1, D), jnp.float32),
        "be2": jnp.zeros((L, 1, D), jnp.float32),
    }
    kf = jax.random.split(ks[13], 2)
    params["fc_w"] = nrm(kf[0], (D, output_vocab_size), dtype=BF16)
    params["fc_b"] = nrm(kf[1], (1, output_vocab_size))
    return params


# --------------------------------------------------------------------------
# Pure-JAX reference with the FULL attention path (Q/K, masked scores,
# softmax, p@V) to verify the algebraic collapse against the torch spec.
# --------------------------------------------------------------------------
def ref_forward(tokens, params, num_heads):
    x = jnp.take(params["emb"], tokens, axis=0).astype(jnp.float32)
    B, S, D = x.shape
    H = num_heads
    hd = D // H
    L = params["wq"].shape[0]

    def mm(a, w, bias):
        return jnp.matmul(a.astype(BF16), w,
                          preferred_element_type=jnp.float32) + bias

    def ln(y, g, b):
        mu = y.mean(-1, keepdims=True)
        var = ((y - mu) ** 2).mean(-1, keepdims=True)
        return (y - mu) * jax.lax.rsqrt(var + 1e-5) * g + b

    eye = jnp.eye(S, dtype=bool)[None, None]
    for li in range(L):
        q = mm(x, params["wq"][li], params["bq"][li]) * (1.0 / math.sqrt(hd))
        k = mm(x, params["wk"][li], params["bk"][li])
        v = mm(x, params["wv"][li], params["bv"][li])
        split = lambda t: t.reshape(B, S, H, hd).transpose(0, 2, 1, 3)
        qh, kh, vh = split(q), split(k), split(v)
        s = jnp.einsum("bhqd,bhkd->bhqk", qh.astype(BF16), kh.astype(BF16),
                       preferred_element_type=jnp.float32)
        s = jnp.where(eye, s, NEG_INF)     # hollow mask: only diag survives
        m = s.max(-1, keepdims=True)
        e = jnp.exp(s - m)
        p = e / e.sum(-1, keepdims=True)
        ctx = jnp.einsum("bhqk,bhkd->bhqd", p.astype(BF16), vh.astype(BF16),
                         preferred_element_type=jnp.float32)
        attn = ctx.transpose(0, 2, 1, 3).reshape(B, S, D)
        attn = mm(attn, params["wo"][li], params["bo"][li])
        x1 = ln(x + attn, params["g1"][li], params["be1"][li])
        h1 = jnp.maximum(mm(x1, params["w1"][li], params["b1"][li]), 0.0)
        ff = mm(h1, params["w2"][li], params["b2"][li])
        x = ln(x1 + ff, params["g2"][li], params["be2"][li])
    return mm(x, params["fc_w"], params["fc_b"])


# --------------------------------------------------------------------------
if __name__ == "__main__":
    num_layers = 2
    num_heads = 4
    d_model = 32
    ff_hidden_dim = 64
    input_vocab_size = 16
    max_seq_length = 8
    output_vocab_size = 16
    batch = 2

    key = jax.random.PRNGKey(0)
    k_tok, k_par = jax.random.split(key)
    tokens = jax.random.randint(k_tok, (batch, max_seq_length), 0,
                                input_vocab_size, dtype=jnp.int32)
    mask = jnp.ones((batch, max_seq_length), jnp.float32)   # unused, as in torch

    params = init_params(k_par, num_layers, d_model, ff_hidden_dim,
                         input_vocab_size, output_vocab_size)

    out = hollow_transformer_forward(tokens, mask, params, num_heads)
    out = jax.block_until_ready(out)

    ref = ref_forward(tokens, params, num_heads)
    assert out.shape == (batch, max_seq_length, output_vocab_size)
    max_err = float(jnp.max(jnp.abs(out - ref)))
    assert jnp.allclose(out, ref, atol=1e-2, rtol=1e-2), max_err

    print("KERNEL_OK")
</pallas_src>

<mosaic_0001>
module attributes {stable_mosaic.version = 11 : i64} {
  func.func @_fused_forward_kernel(%arg0: i32, %arg1: i32, %arg2: memref<1x8x32xf32, #tpu.memory_space<vmem>>, %arg3: memref<1x32x32xbf16, #tpu.memory_space<vmem>>, %arg4: memref<1x1x32xf32, #tpu.memory_space<vmem>>, %arg5: memref<1x32x32xbf16, #tpu.memory_space<vmem>>, %arg6: memref<1x1x32xf32, #tpu.memory_space<vmem>>, %arg7: memref<1x1x32xf32, #tpu.memory_space<vmem>>, %arg8: memref<1x1x32xf32, #tpu.memory_space<vmem>>, %arg9: memref<1x32x64xbf16, #tpu.memory_space<vmem>>, %arg10: memref<1x1x64xf32, #tpu.memory_space<vmem>>, %arg11: memref<1x64x32xbf16, #tpu.memory_space<vmem>>, %arg12: memref<1x1x32xf32, #tpu.memory_space<vmem>>, %arg13: memref<1x1x32xf32, #tpu.memory_space<vmem>>, %arg14: memref<1x1x32xf32, #tpu.memory_space<vmem>>, %arg15: memref<32x128xbf16, #tpu.memory_space<vmem>>, %arg16: memref<1x128xf32, #tpu.memory_space<vmem>>, %arg17: memref<1x8x128xf32, #tpu.memory_space<vmem>>, %arg18: memref<8x32xf32, #tpu.memory_space<vmem>>) attributes {dimension_semantics = [#tpu.dimension_semantics<parallel>, #tpu.dimension_semantics<arbitrary>], iteration_bounds = array<i64: 2, 2>, scalar_prefetch = 0 : i64, scratch_operands = 1 : i64, tpu.core_type = #tpu.core_type<tc>, window_params = [{transform_indices = @transform_0, window_bounds = array<i64: 1, 8, 32>}, {transform_indices = @transform_1, window_bounds = array<i64: 1, 32, 32>}, {transform_indices = @transform_2, window_bounds = array<i64: 1, 1, 32>}, {transform_indices = @transform_3, window_bounds = array<i64: 1, 32, 32>}, {transform_indices = @transform_4, window_bounds = array<i64: 1, 1, 32>}, {transform_indices = @transform_5, window_bounds = array<i64: 1, 1, 32>}, {transform_indices = @transform_6, window_bounds = array<i64: 1, 1, 32>}, {transform_indices = @transform_7, window_bounds = array<i64: 1, 32, 64>}, {transform_indices = @transform_8, window_bounds = array<i64: 1, 1, 64>}, {transform_indices = @transform_9, window_bounds = array<i64: 1, 64, 32>}, {transform_indices = @transform_10, window_bounds = array<i64: 1, 1, 32>}, {transform_indices = @transform_11, window_bounds = array<i64: 1, 1, 32>}, {transform_indices = @transform_12, window_bounds = array<i64: 1, 1, 32>}, {pipeline_mode = #tpu.pipeline_mode<synchronous>, transform_indices = @transform_13, window_bounds = array<i64: 32, 128>}, {pipeline_mode = #tpu.pipeline_mode<synchronous>, transform_indices = @transform_14, window_bounds = array<i64: 1, 128>}, {transform_indices = @transform_15, window_bounds = array<i64: 1, 8, 128>}]} {
    %c0_i32 = arith.constant 0 : i32
    %0 = arith.cmpi eq, %arg1, %c0_i32 : i32
    %1 = arith.extui %0 : i1 to i32
    %c0_i32_0 = arith.constant 0 : i32
    %2 = arith.cmpi ne, %1, %c0_i32_0 : i32
    scf.if %2 {
      %c0_55 = arith.constant 0 : index
      %c0_56 = arith.constant 0 : index
      %c0_57 = arith.constant 0 : index
      %96 = vector.load %arg2[%c0_55, %c0_56, %c0_57] : memref<1x8x32xf32, #tpu.memory_space<vmem>>, vector<1x8x32xf32>
      %97 = vector.shape_cast %96 : vector<1x8x32xf32> to vector<8x32xf32>
      %c0_58 = arith.constant 0 : index
      %c0_59 = arith.constant 0 : index
      %98 = vector.load %arg18[%c0_58, %c0_59] : memref<8x32xf32, #tpu.memory_space<vmem>>, vector<8x32xf32>
      tpu.vector_store %arg18[%c0_58, %c0_59], %97 {strides = array<i32>} : memref<8x32xf32, #tpu.memory_space<vmem>>, vector<8x32xf32>,
    } else {
    }
    %c0 = arith.constant 0 : index
    %c0_1 = arith.constant 0 : index
    %3 = vector.load %arg18[%c0, %c0_1] : memref<8x32xf32, #tpu.memory_space<vmem>>, vector<8x32xf32>
    %4 = arith.truncf %3 : vector<8x32xf32> to vector<8x32xbf16>
    %c0_2 = arith.constant 0 : index
    %c0_3 = arith.constant 0 : index
    %c0_4 = arith.constant 0 : index
    %5 = vector.load %arg3[%c0_2, %c0_3, %c0_4] : memref<1x32x32xbf16, #tpu.memory_space<vmem>>, vector<1x32x32xbf16>
    %6 = vector.shape_cast %5 : vector<1x32x32xbf16> to vector<32x32xbf16>
    %cst = arith.constant dense<0.000000e+00> : vector<8x32xf32>
    %7 = tpu.matmul %4, %6, %cst {dimension_numbers = #tpu.dot_dimension_numbers<[1], [0], [0], [1], [0, 0, 1, 1], [], []>} : vector<8x32xbf16>, vector<32x32xbf16>, vector<8x32xf32> -> vector<8x32xf32>
    %c0_5 = arith.constant 0 : index
    %c0_6 = arith.constant 0 : index
    %c0_7 = arith.constant 0 : index
    %8 = vector.load %arg4[%c0_5, %c0_6, %c0_7] : memref<1x1x32xf32, #tpu.memory_space<vmem>>, vector<1x1x32xf32>
    %9 = vector.shape_cast %8 : vector<1x1x32xf32> to vector<1x32xf32>
    %10 = vector.broadcast %9 : vector<1x32xf32> to vector<8x32xf32>
    %11 = arith.addf %7, %10 : vector<8x32xf32>
    %12 = arith.truncf %11 : vector<8x32xf32> to vector<8x32xbf16>
    %c0_8 = arith.constant 0 : index
    %c0_9 = arith.constant 0 : index
    %c0_10 = arith.constant 0 : index
    %13 = vector.load %arg5[%c0_8, %c0_9, %c0_10] : memref<1x32x32xbf16, #tpu.memory_space<vmem>>, vector<1x32x32xbf16>
    %14 = vector.shape_cast %13 : vector<1x32x32xbf16> to vector<32x32xbf16>
    %cst_11 = arith.constant dense<0.000000e+00> : vector<8x32xf32>
    %15 = tpu.matmul %12, %14, %cst_11 {dimension_numbers = #tpu.dot_dimension_numbers<[1], [0], [0], [1], [0, 0, 1, 1], [], []>} : vector<8x32xbf16>, vector<32x32xbf16>, vector<8x32xf32> -> vector<8x32xf32>
    %c0_12 = arith.constant 0 : index
    %c0_13 = arith.constant 0 : index
    %c0_14 = arith.constant 0 : index
    %16 = vector.load %arg6[%c0_12, %c0_13, %c0_14] : memref<1x1x32xf32, #tpu.memory_space<vmem>>, vector<1x1x32xf32>
    %17 = vector.shape_cast %16 : vector<1x1x32xf32> to vector<1x32xf32>
    %18 = vector.broadcast %17 : vector<1x32xf32> to vector<8x32xf32>
    %19 = arith.addf %15, %18 : vector<8x32xf32>
    %20 = arith.addf %3, %19 : vector<8x32xf32>
    %c0_15 = arith.constant 0 : index
    %c0_16 = arith.constant 0 : index
    %c0_17 = arith.constant 0 : index
    %21 = vector.load %arg7[%c0_15, %c0_16, %c0_17] : memref<1x1x32xf32, #tpu.memory_space<vmem>>, vector<1x1x32xf32>
    %22 = vector.shape_cast %21 : vector<1x1x32xf32> to vector<1x32xf32>
    %c0_18 = arith.constant 0 : index
    %c0_19 = arith.constant 0 : index
    %c0_20 = arith.constant 0 : index
    %23 = vector.load %arg8[%c0_18, %c0_19, %c0_20] : memref<1x1x32xf32, #tpu.memory_space<vmem>>, vector<1x1x32xf32>
    %24 = vector.shape_cast %23 : vector<1x1x32xf32> to vector<1x32xf32>
    %cst_21 = arith.constant dense<0.000000e+00> : vector<8xf32>
    %25 = vector.multi_reduction <add>, %20, %cst_21 [1] : vector<8x32xf32> to vector<8xf32>
    %26 = vector.shape_cast %25 : vector<8xf32> to vector<8x1xf32>
    %cst_22 = arith.constant 3.200000e+01 : f32
    %27 = vector.broadcast %cst_22 : f32 to vector<8x1xf32>
    %28 = arith.divf %26, %27 : vector<8x1xf32>
    %29 = vector.broadcast %28 : vector<8x1xf32> to vector<8x32xf32>
    %30 = arith.subf %20, %29 : vector<8x32xf32>
    %31 = arith.mulf %30, %30 : vector<8x32xf32>
    %cst_23 = arith.constant dense<0.000000e+00> : vector<8xf32>
    %32 = vector.multi_reduction <add>, %31, %cst_23 [1] : vector<8x32xf32> to vector<8xf32>
    %33 = vector.shape_cast %32 : vector<8xf32> to vector<8x1xf32>
    %cst_24 = arith.constant 3.200000e+01 : f32
    %34 = vector.broadcast %cst_24 : f32 to vector<8x1xf32>
    %35 = arith.divf %33, %34 : vector<8x1xf32>
    %36 = vector.broadcast %28 : vector<8x1xf32> to vector<8x32xf32>
    %37 = arith.subf %20, %36 : vector<8x32xf32>
    %cst_25 = arith.constant 9.99999974E-6 : f32
    %38 = vector.broadcast %cst_25 : f32 to vector<8x1xf32>
    %39 = arith.addf %35, %38 : vector<8x1xf32>
    %40 = math.rsqrt %39 : vector<8x1xf32>
    %41 = vector.broadcast %40 : vector<8x1xf32> to vector<8x32xf32>
    %42 = arith.mulf %37, %41 : vector<8x32xf32>
    %43 = vector.broadcast %22 : vector<1x32xf32> to vector<8x32xf32>
    %44 = arith.mulf %42, %43 : vector<8x32xf32>
    %45 = vector.broadcast %24 : vector<1x32xf32> to vector<8x32xf32>
    %46 = arith.addf %44, %45 : vector<8x32xf32>
    %47 = arith.truncf %46 : vector<8x32xf32> to vector<8x32xbf16>
    %c0_26 = arith.constant 0 : index
    %c0_27 = arith.constant 0 : index
    %c0_28 = arith.constant 0 : index
    %48 = vector.load %arg9[%c0_26, %c0_27, %c0_28] : memref<1x32x64xbf16, #tpu.memory_space<vmem>>, vector<1x32x64xbf16>
    %49 = vector.shape_cast %48 : vector<1x32x64xbf16> to vector<32x64xbf16>
    %cst_29 = arith.constant dense<0.000000e+00> : vector<8x64xf32>
    %50 = tpu.matmul %47, %49, %cst_29 {dimension_numbers = #tpu.dot_dimension_numbers<[1], [0], [0], [1], [0, 0, 1, 1], [], []>} : vector<8x32xbf16>, vector<32x64xbf16>, vector<8x64xf32> -> vector<8x64xf32>
    %c0_30 = arith.constant 0 : index
    %c0_31 = arith.constant 0 : index
    %c0_32 = arith.constant 0 : index
    %51 = vector.load %arg10[%c0_30, %c0_31, %c0_32] : memref<1x1x64xf32, #tpu.memory_space<vmem>>, vector<1x1x64xf32>
    %52 = vector.shape_cast %51 : vector<1x1x64xf32> to vector<1x64xf32>
    %53 = vector.broadcast %52 : vector<1x64xf32> to vector<8x64xf32>
    %54 = arith.addf %50, %53 : vector<8x64xf32>
    %cst_33 = arith.constant 0.000000e+00 : f32
    %55 = vector.broadcast %cst_33 : f32 to vector<8x64xf32>
    %56 = arith.maximumf %54, %55 : vector<8x64xf32>
    %57 = arith.truncf %56 : vector<8x64xf32> to vector<8x64xbf16>
    %c0_34 = arith.constant 0 : index
    %c0_35 = arith.constant 0 : index
    %c0_36 = arith.constant 0 : index
    %58 = vector.load %arg11[%c0_34, %c0_35, %c0_36] : memref<1x64x32xbf16, #tpu.memory_space<vmem>>, vector<1x64x32xbf16>
    %59 = vector.shape_cast %58 : vector<1x64x32xbf16> to vector<64x32xbf16>
    %cst_37 = arith.constant dense<0.000000e+00> : vector<8x32xf32>
    %60 = tpu.matmul %57, %59, %cst_37 {dimension_numbers = #tpu.dot_dimension_numbers<[1], [0], [0], [1], [0, 0, 1, 1], [], []>} : vector<8x64xbf16>, vector<64x32xbf16>, vector<8x32xf32> -> vector<8x32xf32>
    %c0_38 = arith.constant 0 : index
    %c0_39 = arith.constant 0 : index
    %c0_40 = arith.constant 0 : index
    %61 = vector.load %arg12[%c0_38, %c0_39, %c0_40] : memref<1x1x32xf32, #tpu.memory_space<vmem>>, vector<1x1x32xf32>
    %62 = vector.shape_cast %61 : vector<1x1x32xf32> to vector<1x32xf32>
    %63 = vector.broadcast %62 : vector<1x32xf32> to vector<8x32xf32>
    %64 = arith.addf %60, %63 : vector<8x32xf32>
    %65 = arith.addf %46, %64 : vector<8x32xf32>
    %c0_41 = arith.constant 0 : index
    %c0_42 = arith.constant 0 : index
    %c0_43 = arith.constant 0 : index
    %66 = vector.load %arg13[%c0_41, %c0_42, %c0_43] : memref<1x1x32xf32, #tpu.memory_space<vmem>>, vector<1x1x32xf32>
    %67 = vector.shape_cast %66 : vector<1x1x32xf32> to vector<1x32xf32>
    %c0_44 = arith.constant 0 : index
    %c0_45 = arith.constant 0 : index
    %c0_46 = arith.constant 0 : index
    %68 = vector.load %arg14[%c0_44, %c0_45, %c0_46] : memref<1x1x32xf32, #tpu.memory_space<vmem>>, vector<1x1x32xf32>
    %69 = vector.shape_cast %68 : vector<1x1x32xf32> to vector<1x32xf32>
    %cst_47 = arith.constant dense<0.000000e+00> : vector<8xf32>
    %70 = vector.multi_reduction <add>, %65, %cst_47 [1] : vector<8x32xf32> to vector<8xf32>
    %71 = vector.shape_cast %70 : vector<8xf32> to vector<8x1xf32>
    %cst_48 = arith.constant 3.200000e+01 : f32
    %72 = vector.broadcast %cst_48 : f32 to vector<8x1xf32>
    %73 = arith.divf %71, %72 : vector<8x1xf32>
    %74 = vector.broadcast %73 : vector<8x1xf32> to vector<8x32xf32>
    %75 = arith.subf %65, %74 : vector<8x32xf32>
    %76 = arith.mulf %75, %75 : vector<8x32xf32>
    %cst_49 = arith.constant dense<0.000000e+00> : vector<8xf32>
    %77 = vector.multi_reduction <add>, %76, %cst_49 [1] : vector<8x32xf32> to vector<8xf32>
    %78 = vector.shape_cast %77 : vector<8xf32> to vector<8x1xf32>
    %cst_50 = arith.constant 3.200000e+01 : f32
    %79 = vector.broadcast %cst_50 : f32 to vector<8x1xf32>
    %80 = arith.divf %78, %79 : vector<8x1xf32>
    %81 = vector.broadcast %73 : vector<8x1xf32> to vector<8x32xf32>
    %82 = arith.subf %65, %81 : vector<8x32xf32>
    %cst_51 = arith.constant 9.99999974E-6 : f32
    %83 = vector.broadcast %cst_51 : f32 to vector<8x1xf32>
    %84 = arith.addf %80, %83 : vector<8x1xf32>
    %85 = math.rsqrt %84 : vector<8x1xf32>
    %86 = vector.broadcast %85 : vector<8x1xf32> to vector<8x32xf32>
    %87 = arith.mulf %82, %86 : vector<8x32xf32>
    %88 = vector.broadcast %67 : vector<1x32xf32> to vector<8x32xf32>
    %89 = arith.mulf %87, %88 : vector<8x32xf32>
    %90 = vector.broadcast %69 : vector<1x32xf32> to vector<8x32xf32>
    %91 = arith.addf %89, %90 : vector<8x32xf32>
    %c0_52 = arith.constant 0 : index
    %c0_53 = arith.constant 0 : index
    %92 = vector.load %arg18[%c0_52, %c0_53] : memref<8x32xf32, #tpu.memory_space<vmem>>, vector<8x32xf32>
    tpu.vector_store %arg18[%c0_52, %c0_53], %91 {strides = array<i32>} : memref<8x32xf32, #tpu.memory_space<vmem>>, vector<8x32xf32>,
    %c1_i32 = arith.constant 1 : i32
    %93 = arith.cmpi eq, %arg1, %c1_i32 : i32
    %94 = arith.extui %93 : i1 to i32
    %c0_i32_54 = arith.constant 0 : i32
    %95 = arith.cmpi ne, %94, %c0_i32_54 : i32
    scf.if %95 {
      %96 = arith.truncf %91 : vector<8x32xf32> to vector<8x32xbf16>
      %c0_55 = arith.constant 0 : index
      %c0_56 = arith.constant 0 : index
      %97 = vector.load %arg15[%c0_55, %c0_56] : memref<32x128xbf16, #tpu.memory_space<vmem>>, vector<32x128xbf16>
      %cst_57 = arith.constant dense<0.000000e+00> : vector<8x128xf32>
      %98 = tpu.matmul %96, %97, %cst_57 {dimension_numbers = #tpu.dot_dimension_numbers<[1], [0], [0], [1], [0, 0, 1, 1], [], []>} : vector<8x32xbf16>, vector<32x128xbf16>, vector<8x128xf32> -> vector<8x128xf32>
      %c0_58 = arith.constant 0 : index
      %c0_59 = arith.constant 0 : index
      %99 = vector.load %arg16[%c0_58, %c0_59] : memref<1x128xf32, #tpu.memory_space<vmem>>, vector<1x128xf32>
      %100 = vector.broadcast %99 : vector<1x128xf32> to vector<8x128xf32>
      %101 = arith.addf %98, %100 : vector<8x128xf32>
      %c0_60 = arith.constant 0 : index
      %c0_61 = arith.constant 0 : index
      %c0_62 = arith.constant 0 : index
      %102 = vector.load %arg17[%c0_60, %c0_61, %c0_62] : memref<1x8x128xf32, #tpu.memory_space<vmem>>, vector<1x8x128xf32>
      %103 = vector.shape_cast %102 : vector<1x8x128xf32> to vector<8x128xf32>
      %104 = vector.shape_cast %101 : vector<8x128xf32> to vector<1x8x128xf32>
      tpu.vector_store %arg17[%c0_60, %c0_61, %c0_62], %104 {strides = array<i32>} : memref<1x8x128xf32, #tpu.memory_space<vmem>>, vector<1x8x128xf32>,
    } else {
    }
    return
  }
  func.func @transform_0(%arg0: i32, %arg1: i32) -> (i32, i32, i32) {
    %c0_i32 = arith.constant 0 : i32
    %c0_i32_0 = arith.constant 0 : i32
    %c0_i32_1 = arith.constant 0 : i32
    return %arg0, %c0_i32, %c0_i32_0 : i32, i32, i32
  }
  func.func @transform_1(%arg0: i32, %arg1: i32) -> (i32, i32, i32) {
    %c0_i32 = arith.constant 0 : i32
    %c0_i32_0 = arith.constant 0 : i32
    %c0_i32_1 = arith.constant 0 : i32
    return %arg1, %c0_i32, %c0_i32_0 : i32, i32, i32
  }
  func.func @transform_2(%arg0: i32, %arg1: i32) -> (i32, i32, i32) {
    %c0_i32 = arith.constant 0 : i32
    %c0_i32_0 = arith.constant 0 : i32
    %c0_i32_1 = arith.constant 0 : i32
    return %arg1, %c0_i32, %c0_i32_0 : i32, i32, i32
  }
  func.func @transform_3(%arg0: i32, %arg1: i32) -> (i32, i32, i32) {
    %c0_i32 = arith.constant 0 : i32
    %c0_i32_0 = arith.constant 0 : i32
    %c0_i32_1 = arith.constant 0 : i32
    return %arg1, %c0_i32, %c0_i32_0 : i32, i32, i32
  }
  func.func @transform_4(%arg0: i32, %arg1: i32) -> (i32, i32, i32) {
    %c0_i32 = arith.constant 0 : i32
    %c0_i32_0 = arith.constant 0 : i32
    %c0_i32_1 = arith.constant 0 : i32
    return %arg1, %c0_i32, %c0_i32_0 : i32, i32, i32
  }
  func.func @transform_5(%arg0: i32, %arg1: i32) -> (i32, i32, i32) {
    %c0_i32 = arith.constant 0 : i32
    %c0_i32_0 = arith.constant 0 : i32
    %c0_i32_1 = arith.constant 0 : i32
    return %arg1, %c0_i32, %c0_i32_0 : i32, i32, i32
  }
  func.func @transform_6(%arg0: i32, %arg1: i32) -> (i32, i32, i32) {
    %c0_i32 = arith.constant 0 : i32
    %c0_i32_0 = arith.constant 0 : i32
    %c0_i32_1 = arith.constant 0 : i32
    return %arg1, %c0_i32, %c0_i32_0 : i32, i32, i32
  }
  func.func @transform_7(%arg0: i32, %arg1: i32) -> (i32, i32, i32) {
    %c0_i32 = arith.constant 0 : i32
    %c0_i32_0 = arith.constant 0 : i32
    %c0_i32_1 = arith.constant 0 : i32
    return %arg1, %c0_i32, %c0_i32_0 : i32, i32, i32
  }
  func.func @transform_8(%arg0: i32, %arg1: i32) -> (i32, i32, i32) {
    %c0_i32 = arith.constant 0 : i32
    %c0_i32_0 = arith.constant 0 : i32
    %c0_i32_1 = arith.constant 0 : i32
    return %arg1, %c0_i32, %c0_i32_0 : i32, i32, i32
  }
  func.func @transform_9(%arg0: i32, %arg1: i32) -> (i32, i32, i32) {
    %c0_i32 = arith.constant 0 : i32
    %c0_i32_0 = arith.constant 0 : i32
    %c0_i32_1 = arith.constant 0 : i32
    return %arg1, %c0_i32, %c0_i32_0 : i32, i32, i32
  }
  func.func @transform_10(%arg0: i32, %arg1: i32) -> (i32, i32, i32) {
    %c0_i32 = arith.constant 0 : i32
    %c0_i32_0 = arith.constant 0 : i32
    %c0_i32_1 = arith.constant 0 : i32
    return %arg1, %c0_i32, %c0_i32_0 : i32, i32, i32
  }
  func.func @transform_11(%arg0: i32, %arg1: i32) -> (i32, i32, i32) {
    %c0_i32 = arith.constant 0 : i32
    %c0_i32_0 = arith.constant 0 : i32
    %c0_i32_1 = arith.constant 0 : i32
    return %arg1, %c0_i32, %c0_i32_0 : i32, i32, i32
  }
  func.func @transform_12(%arg0: i32, %arg1: i32) -> (i32, i32, i32) {
    %c0_i32 = arith.constant 0 : i32
    %c0_i32_0 = arith.constant 0 : i32
    %c0_i32_1 = arith.constant 0 : i32
    return %arg1, %c0_i32, %c0_i32_0 : i32, i32, i32
  }
  func.func @transform_13(%arg0: i32, %arg1: i32) -> (i32, i32) {
    %c0_i32 = arith.constant 0 : i32
    %c0_i32_0 = arith.constant 0 : i32
    %c0_i32_1 = arith.constant 0 : i32
    return %c0_i32, %c0_i32_0 : i32, i32
  }
  func.func @transform_14(%arg0: i32, %arg1: i32) -> (i32, i32) {
    %c0_i32 = arith.constant 0 : i32
    %c0_i32_0 = arith.constant 0 : i32
    %c0_i32_1 = arith.constant 0 : i32
    return %c0_i32, %c0_i32_0 : i32, i32
  }
  func.func @transform_15(%arg0: i32, %arg1: i32) -> (i32, i32, i32) {
    %c0_i32 = arith.constant 0 : i32
    %c0_i32_0 = arith.constant 0 : i32
    %c0_i32_1 = arith.constant 0 : i32
    return %arg0, %c0_i32, %c0_i32_0 : i32, i32, i32
  }
}

</mosaic_0001>

<llo_original>
// kernel: tpu_custom_call.1
$region0: #{tpu_custom_call.1}
  #allocation0 [shape = 'u32[]', space=smem, size = 0x4, offset = 0x4, fixed_abs, tag = 'smem constant byte address 0x4 - core index']
  #allocation1 [shape = 'u32[72,128]{1,0:T(1,128)}', space=vmem, size = 0x9000, scoped, tag = 'internal scratch']
  #allocation2 [shape = 'f32[8,32]{1,0:T(8,128)}', space=vmem, size = 0x1000, scoped, tag = 'scratch operand']
  %s0 = inlined_call_operand.hbm [shape: f32[2,8,32], index: 0, kind: input, shape index: {}]
  %s1 = inlined_call_operand.vmem [shape: bf16[2,32,32], index: 1, kind: input, shape index: {}]
  %s2 = inlined_call_operand.hbm [shape: f32[2,1,32], index: 2, kind: input, shape index: {}]
  %s3 = inlined_call_operand.vmem [shape: bf16[2,32,32], index: 3, kind: input, shape index: {}]
  %s4 = inlined_call_operand.vmem [shape: f32[2,1,32], index: 4, kind: input, shape index: {}]
  %s5 = inlined_call_operand.hbm [shape: f32[2,1,32], index: 5, kind: input, shape index: {}]
  %s6 = inlined_call_operand.vmem [shape: f32[2,1,32], index: 6, kind: input, shape index: {}]
  %s7 = inlined_call_operand.vmem [shape: bf16[2,32,64], index: 7, kind: input, shape index: {}]
  %s8 = inlined_call_operand.vmem [shape: f32[2,1,64], index: 8, kind: input, shape index: {}]
  %s9 = inlined_call_operand.vmem [shape: bf16[2,64,32], index: 9, kind: input, shape index: {}]
  %s10 = inlined_call_operand.vmem [shape: f32[2,1,32], index: 10, kind: input, shape index: {}]
  %s11 = inlined_call_operand.hbm [shape: f32[2,1,32], index: 11, kind: input, shape index: {}]
  %s12 = inlined_call_operand.vmem [shape: f32[2,1,32], index: 12, kind: input, shape index: {}]
  %s13 = inlined_call_operand.hbm [shape: bf16[32,128], index: 13, kind: input, shape index: {}]
  %s14 = inlined_call_operand.vmem [shape: f32[1,128], index: 14, kind: input, shape index: {}]
  %s15 = inlined_call_operand.hbm [shape: f32[2,8,128], index: 15, kind: output, shape index: {}]
  %s16 = sld [smem:[#allocation0]]
  $region121: #{tpu_custom_call.1} parent=0
    _
  %s18 = ssub.s32 1, %s16
  %s19 = scalar_select 0, %s18, %s16
  $region1: #{tpu_custom_call.1} parent=0
    #allocation3 [shape = 'u8[8192]{0}', space=vmem, size = 0x2000, scoped, tag = 'input window, operand 0']
    #allocation4 [shape = 's32[2]{0}', space=sflag, size = 0x8, scoped, tag = 'scoped memory for tpu_custom_call.1']
    #allocation5 [shape = 's32[2]{0}', space=sflag, size = 0x8, scoped, tag = 'scoped memory for tpu_custom_call.1']
    #allocation6 [shape = 'u8[1024]{0}', space=vmem, size = 0x400, scoped, tag = 'input window, operand 2']
    #allocation7 [shape = 's32[2]{0}', space=sflag, size = 0x8, scoped, tag = 'scoped memory for tpu_custom_call.1']
    #allocation8 [shape = 'u8[1024]{0}', space=vmem, size = 0x400, scoped, tag = 'input window, operand 5']
    #allocation9 [shape = 'u8[1024]{0}', space=vmem, size = 0x400, scoped, tag = 'input window, operand 11']
    #allocation10 [shape = 's32[2]{0}', space=sflag, size = 0x8, scoped, tag = 'scoped memory for tpu_custom_call.1']
    #allocation11 [shape = 'u8[8192]{0}', space=vmem, size = 0x2000, scoped, tag = 'input window, operand 13, single buffered']
    #allocation12 [shape = 'u8[8192]{0}', space=vmem, size = 0x2000, scoped, tag = 'output window, operand 0']
    %20 = vsyncpa [#allocation4], 0
    %s21 = scalar_lea.sflag [#allocation4], 1
    %22 = vsyncpa %s21, 0
    %23 = vsyncpa [#allocation7], 0
    %s24 = scalar_lea.sflag [#allocation7], 1
    %25 = vsyncpa %s24, 0
    %26 = vsyncpa [#allocation10], 0
    %s27 = scalar_lea.sflag [#allocation10], 1
    %28 = vsyncpa %s27, 0
    %29 = vsyncpa [#allocation5], 0
    %s30 = scalar_lea.sflag [#allocation5], 1
    %31 = vsyncpa %s30, 0
    loop: start=0, step=1, limit=6
    $region2: #{tpu_custom_call.1} parent=1 // loop_pre_header
      _
    $region3: #{tpu_custom_call.1} parent=1 // loop_header
      %s33 = sphi 0, %s37
      %p34 = scmp.ge.s32.totalorder %s33, 6
      %s40 = sphi 0, %s52
      %s41 = sphi 0, %s48
      %s42 = sphi 0, %s40
      %s43 = sphi 0, %s41
      %s44 = sphi 0, %s42
      %s45 = sphi 0, %s43
      %s55 = sphi 0, %s57
      %s58 = sphi 0, %s55
      %s59 = sphi 0, %s58
      %s75 = sphi 0, %s59
      %s81 = sphi 0, %s83
      %s84 = sphi 0, %s81
      %s85 = sphi 0, %s84
      %s101 = sphi 0, %s85
      %s107 = sphi 0, %s109
      %s110 = sphi 0, %s107
      %s111 = sphi 0, %s110
      %s127 = sphi 0, %s111
      %s133 = sphi 0, %s135
      %s136 = sphi 0, %s133
      %s137 = sphi 0, %s136
      %s153 = sphi 0, %s137
      %s159 = sphi 0, %s161
      %s162 = sphi 0, %s159
      %s163 = sphi 0, %s162
      %s179 = sphi 0, %s163
      %s185 = sphi 0, %s187
      %s188 = sphi 0, %s185
      %s189 = sphi 0, %s188
      %s205 = sphi 0, %s189
      %s211 = sphi 0, %s213
      %s214 = sphi 0, %s211
      %s215 = sphi 0, %s214
      %s231 = sphi 0, %s215
      %s237 = sphi 0, %s239
      %s240 = sphi 0, %s237
      %s241 = sphi 0, %s240
      %s257 = sphi 0, %s241
      %s263 = sphi 0, %s265
      %s266 = sphi 0, %s263
      %s267 = sphi 0, %s266
      %s283 = sphi 0, %s267
      %s289 = sphi 0, %s291
      %s292 = sphi 0, %s289
      %s293 = sphi 0, %s292
      %s309 = sphi 0, %s293
      %s315 = sphi 0, %s317
      %s318 = sphi 0, %s315
      %s319 = sphi 0, %s318
      %s335 = sphi 0, %s319
      %s341 = sphi 0, %s343
      %s344 = sphi 0, %s341
      %s345 = sphi 0, %s344
      %s361 = sphi 0, %s345
      %s367 = sphi 0, %s369
      %s370 = sphi 0, %s367
      %s371 = sphi 0, %s370
      %s387 = sphi 0, %s371
      %s391 = sphi 0, %s391
      %s393 = sphi 0, %s391
      %s394 = sphi 0, %s393
      %s408 = sphi 0, %s394
      %s412 = sphi 0, %s412
      %s414 = sphi 0, %s412
      %s415 = sphi 0, %s414
      %s429 = sphi 0, %s415
      %s435 = sphi 0, %s437
      %s438 = sphi 0, %s435
      %s439 = sphi 0, %s438
      %s455 = sphi 0, %s439
    $region4: #{tpu_custom_call.1} parent=1 // loop_header_branch
      %36 = sbr.rel (%p34) target = $region8
    $region5: #{tpu_custom_call.1} parent=1 // loop_body
      %s38 = ssub.s32 %s33, 1
      %s39 = ssub.s32 %s33, 2
      %s46 = sadd.s32 1, %s41
      %p47 = scmp.ge.s32.totalorder %s46, 2
      %s48 = scalar_select %p47, 0, %s46
      %s49 = sadd.s32 1, %s40
      %s50 = scalar_select %p47, %s49, %s40
      %p51 = scmp.ge.s32.totalorder %s50, 2
      %s52 = scalar_select %p51, 0, %s50
      %s53 = ssub.s32 %s40, %s52
      %p54 = scmp.eq.s32.totalorder %s53, 0
      %s56 = sadd.s32 %s55, 1
      %s57 = scalar_select %p54, %s55, %s56
      %p60 = pneg %p54
      %p61 = scmp.eq.s32.totalorder %s33, 3
      %p62 = por %p60, %p61
      %p63 = scmp.ne.s32.totalorder %s55, %s58
      %p64 = scmp.eq.s32.totalorder %s33, 0
      %p65 = por %p63, %p64
      %p66 = scmp.ne.s32.totalorder %s55, %s58
      %p67 = scmp.eq.s32.totalorder %s38, 3
      %p68 = por %p66, %p67
      %p69 = scmp.ne.s32.totalorder %s58, %s59
      %p70 = scmp.eq.s32.totalorder %s38, 0
      %p71 = por %p69, %p70
      %p72 = scmp.ne.s32.totalorder %s58, %s59
      %p73 = scmp.eq.s32.totalorder %s39, 3
      %p74 = por %p72, %p73
      %p76 = scmp.ne.s32.totalorder %s59, %s75
      %p77 = scmp.eq.s32.totalorder %s39, 0
      %p78 = por %p76, %p77
      %s79 = ssub.s32 %s41, %s48
      %p80 = scmp.eq.s32.totalorder %s79, 0
      %s82 = sadd.s32 %s81, 1
      %s83 = scalar_select %p80, %s81, %s82
      %p86 = pneg %p80
      %p87 = scmp.eq.s32.totalorder %s33, 3
      %p88 = por %p86, %p87
      %p89 = scmp.ne.s32.totalorder %s81, %s84
      %p90 = scmp.eq.s32.totalorder %s33, 0
      %p91 = por %p89, %p90
      %p92 = scmp.ne.s32.totalorder %s81, %s84
      %p93 = scmp.eq.s32.totalorder %s38, 3
      %p94 = por %p92, %p93
      %p95 = scmp.ne.s32.totalorder %s84, %s85
      %p96 = scmp.eq.s32.totalorder %s38, 0
      %p97 = por %p95, %p96
      %p98 = scmp.ne.s32.totalorder %s84, %s85
      %p99 = scmp.eq.s32.totalorder %s39, 3
      %p100 = por %p98, %p99
      %p102 = scmp.ne.s32.totalorder %s85, %s101
      %p103 = scmp.eq.s32.totalorder %s39, 0
      %p104 = por %p102, %p103
      %s105 = ssub.s32 %s41, %s48
      %p106 = scmp.eq.s32.totalorder %s105, 0
      %s108 = sadd.s32 %s107, 1
      %s109 = scalar_select %p106, %s107, %s108
      %p112 = pneg %p106
      %p113 = scmp.eq.s32.totalorder %s33, 3
      %p114 = por %p112, %p113
      %p115 = scmp.ne.s32.totalorder %s107, %s110
      %p116 = scmp.eq.s32.totalorder %s33, 0
      %p117 = por %p115, %p116
      %p118 = scmp.ne.s32.totalorder %s107, %s110
      %p119 = scmp.eq.s32.totalorder %s38, 3
      %p120 = por %p118, %p119
      %p121 = scmp.ne.s32.totalorder %s110, %s111
      %p122 = scmp.eq.s32.totalorder %s38, 0
      %p123 = por %p121, %p122
      %p124 = scmp.ne.s32.totalorder %s110, %s111
      %p125 = scmp.eq.s32.totalorder %s39, 3
      %p126 = por %p124, %p125
      %p128 = scmp.ne.s32.totalorder %s111, %s127
      %p129 = scmp.eq.s32.totalorder %s39, 0
      %p130 = por %p128, %p129
      %s131 = ssub.s32 %s41, %s48
      %p132 = scmp.eq.s32.totalorder %s131, 0
      %s134 = sadd.s32 %s133, 1
      %s135 = scalar_select %p132, %s133, %s134
      %p138 = pneg %p132
      %p139 = scmp.eq.s32.totalorder %s33, 3
      %p140 = por %p138, %p139
      %p141 = scmp.ne.s32.totalorder %s133, %s136
      %p142 = scmp.eq.s32.totalorder %s33, 0
      %p143 = por %p141, %p142
      %p144 = scmp.ne.s32.totalorder %s133, %s136
      %p145 = scmp.eq.s32.totalorder %s38, 3
      %p146 = por %p144, %p145
      %p147 = scmp.ne.s32.totalorder %s136, %s137
      %p148 = scmp.eq.s32.totalorder %s38, 0
      %p149 = por %p147, %p148
      %p150 = scmp.ne.s32.totalorder %s136, %s137
      %p151 = scmp.eq.s32.totalorder %s39, 3
      %p152 = por %p150, %p151
      %p154 = scmp.ne.s32.totalorder %s137, %s153
      %p155 = scmp.eq.s32.totalorder %s39, 0
      %p156 = por %p154, %p155
      %s157 = ssub.s32 %s41, %s48
      %p158 = scmp.eq.s32.totalorder %s157, 0
      %s160 = sadd.s32 %s159, 1
      %s161 = scalar_select %p158, %s159, %s160
      %p164 = pneg %p158
      %p165 = scmp.eq.s32.totalorder %s33, 3
      %p166 = por %p164, %p165
      %p167 = scmp.ne.s32.totalorder %s159, %s162
      %p168 = scmp.eq.s32.totalorder %s33, 0
      %p169 = por %p167, %p168
      %p170 = scmp.ne.s32.totalorder %s159, %s162
      %p171 = scmp.eq.s32.totalorder %s38, 3
      %p172 = por %p170, %p171
      %p173 = scmp.ne.s32.totalorder %s162, %s163
      %p174 = scmp.eq.s32.totalorder %s38, 0
      %p175 = por %p173, %p174
      %p176 = scmp.ne.s32.totalorder %s162, %s163
      %p177 = scmp.eq.s32.totalorder %s39, 3
      %p178 = por %p176, %p177
      %p180 = scmp.ne.s32.totalorder %s163, %s179
      %p181 = scmp.eq.s32.totalorder %s39, 0
      %p182 = por %p180, %p181
      %s183 = ssub.s32 %s41, %s48
      %p184 = scmp.eq.s32.totalorder %s183, 0
      %s186 = sadd.s32 %s185, 1
      %s187 = scalar_select %p184, %s185, %s186
      %p190 = pneg %p184
      %p191 = scmp.eq.s32.totalorder %s33, 3
      %p192 = por %p190, %p191
      %p193 = scmp.ne.s32.totalorder %s185, %s188
      %p194 = scmp.eq.s32.totalorder %s33, 0
      %p195 = por %p193, %p194
      %p196 = scmp.ne.s32.totalorder %s185, %s188
      %p197 = scmp.eq.s32.totalorder %s38, 3
      %p198 = por %p196, %p197
      %p199 = scmp.ne.s32.totalorder %s188, %s189
      %p200 = scmp.eq.s32.totalorder %s38, 0
      %p201 = por %p199, %p200
      %p202 = scmp.ne.s32.totalorder %s188, %s189
      %p203 = scmp.eq.s32.totalorder %s39, 3
      %p204 = por %p202, %p203
      %p206 = scmp.ne.s32.totalorder %s189, %s205
      %p207 = scmp.eq.s32.totalorder %s39, 0
      %p208 = por %p206, %p207
      %s209 = ssub.s32 %s41, %s48
      %p210 = scmp.eq.s32.totalorder %s209, 0
      %s212 = sadd.s32 %s211, 1
      %s213 = scalar_select %p210, %s211, %s212
      %p216 = pneg %p210
      %p217 = scmp.eq.s32.totalorder %s33, 3
      %p218 = por %p216, %p217
      %p219 = scmp.ne.s32.totalorder %s211, %s214
      %p220 = scmp.eq.s32.totalorder %s33, 0
      %p221 = por %p219, %p220
      %p222 = scmp.ne.s32.totalorder %s211, %s214
      %p223 = scmp.eq.s32.totalorder %s38, 3
      %p224 = por %p222, %p223
      %p225 = scmp.ne.s32.totalorder %s214, %s215
      %p226 = scmp.eq.s32.totalorder %s38, 0
      %p227 = por %p225, %p226
      %p228 = scmp.ne.s32.totalorder %s214, %s215
      %p229 = scmp.eq.s32.totalorder %s39, 3
      %p230 = por %p228, %p229
      %p232 = scmp.ne.s32.totalorder %s215, %s231
      %p233 = scmp.eq.s32.totalorder %s39, 0
      %p234 = por %p232, %p233
      %s235 = ssub.s32 %s41, %s48
      %p236 = scmp.eq.s32.totalorder %s235, 0
      %s238 = sadd.s32 %s237, 1
      %s239 = scalar_select %p236, %s237, %s238
      %p242 = pneg %p236
      %p243 = scmp.eq.s32.totalorder %s33, 3
      %p244 = por %p242, %p243
      %p245 = scmp.ne.s32.totalorder %s237, %s240
      %p246 = scmp.eq.s32.totalorder %s33, 0
      %p247 = por %p245, %p246
      %p248 = scmp.ne.s32.totalorder %s237, %s240
      %p249 = scmp.eq.s32.totalorder %s38, 3
      %p250 = por %p248, %p249
      %p251 = scmp.ne.s32.totalorder %s240, %s241
      %p252 = scmp.eq.s32.totalorder %s38, 0
      %p253 = por %p251, %p252
      %p254 = scmp.ne.s32.totalorder %s240, %s241
      %p255 = scmp.eq.s32.totalorder %s39, 3
      %p256 = por %p254, %p255
      %p258 = scmp.ne.s32.totalorder %s241, %s257
      %p259 = scmp.eq.s32.totalorder %s39, 0
      %p260 = por %p258, %p259
      %s261 = ssub.s32 %s41, %s48
      %p262 = scmp.eq.s32.totalorder %s261, 0
      %s264 = sadd.s32 %s263, 1
      %s265 = scalar_select %p262, %s263, %s264
      %p268 = pneg %p262
      %p269 = scmp.eq.s32.totalorder %s33, 3
      %p270 = por %p268, %p269
      %p271 = scmp.ne.s32.totalorder %s263, %s266
      %p272 = scmp.eq.s32.totalorder %s33, 0
      %p273 = por %p271, %p272
      %p274 = scmp.ne.s32.totalorder %s263, %s266
      %p275 = scmp.eq.s32.totalorder %s38, 3
      %p276 = por %p274, %p275
      %p277 = scmp.ne.s32.totalorder %s266, %s267
      %p278 = scmp.eq.s32.totalorder %s38, 0
      %p279 = por %p277, %p278
      %p280 = scmp.ne.s32.totalorder %s266, %s267
      %p281 = scmp.eq.s32.totalorder %s39, 3
      %p282 = por %p280, %p281
      %p284 = scmp.ne.s32.totalorder %s267, %s283
      %p285 = scmp.eq.s32.totalorder %s39, 0
      %p286 = por %p284, %p285
      %s287 = ssub.s32 %s41, %s48
      %p288 = scmp.eq.s32.totalorder %s287, 0
      %s290 = sadd.s32 %s289, 1
      %s291 = scalar_select %p288, %s289, %s290
      %p294 = pneg %p288
      %p295 = scmp.eq.s32.totalorder %s33, 3
      %p296 = por %p294, %p295
      %p297 = scmp.ne.s32.totalorder %s289, %s292
      %p298 = scmp.eq.s32.totalorder %s33, 0
      %p299 = por %p297, %p298
      %p300 = scmp.ne.s32.totalorder %s289, %s292
      %p301 = scmp.eq.s32.totalorder %s38, 3
      %p302 = por %p300, %p301
      %p303 = scmp.ne.s32.totalorder %s292, %s293
      %p304 = scmp.eq.s32.totalorder %s38, 0
      %p305 = por %p303, %p304
      %p306 = scmp.ne.s32.totalorder %s292, %s293
      %p307 = scmp.eq.s32.totalorder %s39, 3
      %p308 = por %p306, %p307
      %p310 = scmp.ne.s32.totalorder %s293, %s309
      %p311 = scmp.eq.s32.totalorder %s39, 0
      %p312 = por %p310, %p311
      %s313 = ssub.s32 %s41, %s48
      %p314 = scmp.eq.s32.totalorder %s313, 0
      %s316 = sadd.s32 %s315, 1
      %s317 = scalar_select %p314, %s315, %s316
      %p320 = pneg %p314
      %p321 = scmp.eq.s32.totalorder %s33, 3
      %p322 = por %p320, %p321
      %p323 = scmp.ne.s32.totalorder %s315, %s318
      %p324 = scmp.eq.s32.totalorder %s33, 0
      %p325 = por %p323, %p324
      %p326 = scmp.ne.s32.totalorder %s315, %s318
      %p327 = scmp.eq.s32.totalorder %s38, 3
      %p328 = por %p326, %p327
      %p329 = scmp.ne.s32.totalorder %s318, %s319
      %p330 = scmp.eq.s32.totalorder %s38, 0
      %p331 = por %p329, %p330
      %p332 = scmp.ne.s32.totalorder %s318, %s319
      %p333 = scmp.eq.s32.totalorder %s39, 3
      %p334 = por %p332, %p333
      %p336 = scmp.ne.s32.totalorder %s319, %s335
      %p337 = scmp.eq.s32.totalorder %s39, 0
      %p338 = por %p336, %p337
      %s339 = ssub.s32 %s41, %s48
      %p340 = scmp.eq.s32.totalorder %s339, 0
      %s342 = sadd.s32 %s341, 1
      %s343 = scalar_select %p340, %s341, %s342
      %p346 = pneg %p340
      %p347 = scmp.eq.s32.totalorder %s33, 3
      %p348 = por %p346, %p347
      %p349 = scmp.ne.s32.totalorder %s341, %s344
      %p350 = scmp.eq.s32.totalorder %s33, 0
      %p351 = por %p349, %p350
      %p352 = scmp.ne.s32.totalorder %s341, %s344
      %p353 = scmp.eq.s32.totalorder %s38, 3
      %p354 = por %p352, %p353
      %p355 = scmp.ne.s32.totalorder %s344, %s345
      %p356 = scmp.eq.s32.totalorder %s38, 0
      %p357 = por %p355, %p356
      %p358 = scmp.ne.s32.totalorder %s344, %s345
      %p359 = scmp.eq.s32.totalorder %s39, 3
      %p360 = por %p358, %p359
      %p362 = scmp.ne.s32.totalorder %s345, %s361
      %p363 = scmp.eq.s32.totalorder %s39, 0
      %p364 = por %p362, %p363
      %s365 = ssub.s32 %s41, %s48
      %p366 = scmp.eq.s32.totalorder %s365, 0
      %s368 = sadd.s32 %s367, 1
      %s369 = scalar_select %p366, %s367, %s368
      %p372 = pneg %p366
      %p373 = scmp.eq.s32.totalorder %s33, 3
      %p374 = por %p372, %p373
      %p375 = scmp.ne.s32.totalorder %s367, %s370
      %p376 = scmp.eq.s32.totalorder %s33, 0
      %p377 = por %p375, %p376
      %p378 = scmp.ne.s32.totalorder %s367, %s370
      %p379 = scmp.eq.s32.totalorder %s38, 3
      %p380 = por %p378, %p379
      %p381 = scmp.ne.s32.totalorder %s370, %s371
      %p382 = scmp.eq.s32.totalorder %s38, 0
      %p383 = por %p381, %p382
      %p384 = scmp.ne.s32.totalorder %s370, %s371
      %p385 = scmp.eq.s32.totalorder %s39, 3
      %p386 = por %p384, %p385
      %p388 = scmp.ne.s32.totalorder %s371, %s387
      %p389 = scmp.eq.s32.totalorder %s39, 0
      %p390 = por %p388, %p389
      %s392 = sadd.s32 %s391, 1
      %p395 = scmp.eq.s32.totalorder %s33, 3
      %p396 = scmp.ne.s32.totalorder %s391, %s393
      %p397 = scmp.eq.s32.totalorder %s33, 0
      %p398 = por %p396, %p397
      %p399 = scmp.ne.s32.totalorder %s391, %s393
      %p400 = scmp.eq.s32.totalorder %s38, 3
      %p401 = por %p399, %p400
      %p402 = scmp.ne.s32.totalorder %s393, %s394
      %p403 = scmp.eq.s32.totalorder %s38, 0
      %p404 = por %p402, %p403
      %p405 = scmp.ne.s32.totalorder %s393, %s394
      %p406 = scmp.eq.s32.totalorder %s39, 3
      %p407 = por %p405, %p406
      %p409 = scmp.ne.s32.totalorder %s394, %s408
      %p410 = scmp.eq.s32.totalorder %s39, 0
      %p411 = por %p409, %p410
      %s413 = sadd.s32 %s412, 1
      %p416 = scmp.eq.s32.totalorder %s33, 3
      %p417 = scmp.ne.s32.totalorder %s412, %s414
      %p418 = scmp.eq.s32.totalorder %s33, 0
      %p419 = por %p417, %p418
      %p420 = scmp.ne.s32.totalorder %s412, %s414
      %p421 = scmp.eq.s32.totalorder %s38, 3
      %p422 = por %p420, %p421
      %p423 = scmp.ne.s32.totalorder %s414, %s415
      %p424 = scmp.eq.s32.totalorder %s38, 0
      %p425 = por %p423, %p424
      %p426 = scmp.ne.s32.totalorder %s414, %s415
      %p427 = scmp.eq.s32.totalorder %s39, 3
      %p428 = por %p426, %p427
      %p430 = scmp.ne.s32.totalorder %s415, %s429
      %p431 = scmp.eq.s32.totalorder %s39, 0
      %p432 = por %p430, %p431
      %s433 = ssub.s32 %s40, %s52
      %p434 = scmp.eq.s32.totalorder %s433, 0
      %s436 = sadd.s32 %s435, 1
      %s437 = scalar_select %p434, %s435, %s436
      %p440 = pneg %p434
      %p441 = scmp.eq.s32.totalorder %s33, 3
      %p442 = por %p440, %p441
      %p443 = scmp.ne.s32.totalorder %s435, %s438
      %p444 = scmp.eq.s32.totalorder %s33, 0
      %p445 = por %p443, %p444
      %p446 = scmp.ne.s32.totalorder %s435, %s438
      %p447 = scmp.eq.s32.totalorder %s38, 3
      %p448 = por %p446, %p447
      %p449 = scmp.ne.s32.totalorder %s438, %s439
      %p450 = scmp.eq.s32.totalorder %s38, 0
      %p451 = por %p449, %p450
      %p452 = scmp.ne.s32.totalorder %s438, %s439
      %p453 = scmp.eq.s32.totalorder %s39, 3
      %p454 = por %p452, %p453
      %p456 = scmp.ne.s32.totalorder %s439, %s455
      %p457 = scmp.eq.s32.totalorder %s39, 0
      %p458 = por %p456, %p457
      %p459 = scmp.le.s32.totalorder 1, %s33
      %p460 = scmp.lt.s32.totalorder %s33, 5
      %p461 = pnand %p459, %p460
      %p462 = pneg %p461
      // Predicated region
      $region9: #{tpu_custom_call.1} parent=5 // pred_check
        _
      $region10: #{tpu_custom_call.1} parent=5 // pred_check_branch
        %464 = sbr.rel (%p461) target = $region12
      $region11: #{tpu_custom_call.1} parent=5 // pred_region
        %s465 = ssub.s32 %s33, 1
        // Predicated region
        $region13: #{tpu_custom_call.1} parent=11 // pred_check
          %p466 = pneg %p404
        $region14: #{tpu_custom_call.1} parent=11 // pred_check_branch
          %468 = sbr.rel (%p466) target = $region16
        $region15: #{tpu_custom_call.1} parent=11 // pred_region
          %470 = vsyncadd [#allocation10], 0
          %s471 = sshll.u32 %s13, 4
          %s472 = int_to_ptr.hbm [resolvable:$true] %s471
          %s473 = sshll.u32 [#allocation11], 4
          %s474 = int_to_ptr.vmem [resolvable:$true] %s473
          %479 = dma.hbm_to_vmem [thread:$0]  %s472, 256, %s474, [#allocation10], 64, 64, 4
        $region16: #{tpu_custom_call.1} parent=11 // pred_fallthru
          _
        // Predicated region
        $region17: #{tpu_custom_call.1} parent=11 // pred_check
          %p480 = pneg %p425
        $region18: #{tpu_custom_call.1} parent=11 // pred_check_branch
          %482 = sbr.rel (%p480) target = $region20
        $region19: #{tpu_custom_call.1} parent=11 // pred_region
          _
        $region20: #{tpu_custom_call.1} parent=11 // pred_fallthru
          _
      $region12: #{tpu_custom_call.1} parent=5 // pred_fallthru
        _
      %p483 = scmp.lt.s32.totalorder %s33, 4
      // Predicated region
      $region21: #{tpu_custom_call.1} parent=5 // pred_check
        %p484 = pneg %p483
      $region22: #{tpu_custom_call.1} parent=5 // pred_check_branch
        %486 = sbr.rel (%p484) target = $region24
      $region23: #{tpu_custom_call.1} parent=5 // pred_region
        // Predicated region
        $region25: #{tpu_custom_call.1} parent=23 // pred_check
          %p487 = pneg %p65
        $region26: #{tpu_custom_call.1} parent=23 // pred_check_branch
          %489 = sbr.rel (%p487) target = $region28
        $region27: #{tpu_custom_call.1} parent=23 // pred_region
          %s490 = sand.u32 %s55, 1
          %s491 = scalar_lea.sflag [#allocation4], %s490
          %s492 = sand.u32 %s55, 1
          %s493 = smul.addr %s492, 8
          %s494 = scalar_lea.vmem [#allocation3], %s493
          %496 = vsyncadd %s491, 0
          %s497 = smul.addr %s40, 8
          %s498 = scalar_lea.hbm %s0, %s497
          %s500 = sshll.u32 %s498, 4
          %s501 = int_to_ptr.hbm [resolvable:$true] %s500
          %s502 = sshll.u32 %s494, 4
          %s503 = int_to_ptr.vmem [resolvable:$true] %s502
          %505 = dma.hbm_to_vmem [thread:$0]  %s501, 128, %s503, %s491
        $region28: #{tpu_custom_call.1} parent=23 // pred_fallthru
          _
        // Predicated region
        $region29: #{tpu_custom_call.1} parent=23 // pred_check
          %p506 = pneg %p91
        $region30: #{tpu_custom_call.1} parent=23 // pred_check_branch
          %508 = sbr.rel (%p506) target = $region32
        $region31: #{tpu_custom_call.1} parent=23 // pred_region
          %p509 = scmp.lt.s32.totalorder %s41, 1
          %s510 = scalar_select %p509, %s41, 1
          %s511 = smul.addr %s510, 4
          %s512 = smul.addr %s511, 4
          %s513 = scalar_lea.vmem %s1, %s512
        $region32: #{tpu_custom_call.1} parent=23 // pred_fallthru
          _
        // Predicated region
        $region33: #{tpu_custom_call.1} parent=23 // pred_check
          %p514 = pneg %p117
        $region34: #{tpu_custom_call.1} parent=23 // pred_check_branch
          %516 = sbr.rel (%p514) target = $region36
        $region35: #{tpu_custom_call.1} parent=23 // pred_region
          %s517 = sand.u32 %s33, 1
          %s518 = scalar_lea.sflag [#allocation7], %s517
          %s519 = sand.u32 %s107, 1
          %s520 = scalar_lea.vmem [#allocation6], %s519
          %522 = vsyncadd %s518, 0
          %s523 = scalar_lea.hbm %s2, %s41
          %s525 = sshll.u32 %s523, 4
          %s526 = int_to_ptr.hbm [resolvable:$true] %s525
          %s527 = sshll.u32 %s520, 4
          %s528 = int_to_ptr.vmem [resolvable:$true] %s527
          %530 = dma.hbm_to_vmem [thread:$0]  %s526, 16, %s528, %s518
        $region36: #{tpu_custom_call.1} parent=23 // pred_fallthru
          _
        // Predicated region
        $region37: #{tpu_custom_call.1} parent=23 // pred_check
          %p531 = pneg %p143
        $region38: #{tpu_custom_call.1} parent=23 // pred_check_branch
          %533 = sbr.rel (%p531) target = $region40
        $region39: #{tpu_custom_call.1} parent=23 // pred_region
          %p534 = scmp.lt.s32.totalorder %s41, 1
          %s535 = scalar_select %p534, %s41, 1
          %s536 = smul.addr %s535, 4
          %s537 = smul.addr %s536, 4
          %s538 = scalar_lea.vmem %s3, %s537
        $region40: #{tpu_custom_call.1} parent=23 // pred_fallthru
          _
        // Predicated region
        $region41: #{tpu_custom_call.1} parent=23 // pred_check
          %p539 = pneg %p169
        $region42: #{tpu_custom_call.1} parent=23 // pred_check_branch
          %541 = sbr.rel (%p539) target = $region44
        $region43: #{tpu_custom_call.1} parent=23 // pred_region
          %p542 = scmp.lt.s32.totalorder %s41, 1
          %s543 = scalar_select %p542, %s41, 1
          %s544 = scalar_lea.vmem %s4, %s543
        $region44: #{tpu_custom_call.1} parent=23 // pred_fallthru
          _
        // Predicated region
        $region45: #{tpu_custom_call.1} parent=23 // pred_check
          %p545 = pneg %p195
        $region46: #{tpu_custom_call.1} parent=23 // pred_check_branch
          %547 = sbr.rel (%p545) target = $region48
        $region47: #{tpu_custom_call.1} parent=23 // pred_region
          %s548 = sand.u32 %s33, 1
          %s549 = scalar_lea.sflag [#allocation7], %s548
          %s550 = sand.u32 %s185, 1
          %s551 = scalar_lea.vmem [#allocation8], %s550
          %553 = vsyncadd %s549, 0
          %s554 = scalar_lea.hbm %s5, %s41
          %s556 = sshll.u32 %s554, 4
          %s557 = int_to_ptr.hbm [resolvable:$true] %s556
          %s558 = sshll.u32 %s551, 4
          %s559 = int_to_ptr.vmem [resolvable:$true] %s558
          %561 = dma.hbm_to_vmem [thread:$0]  %s557, 16, %s559, %s549
        $region48: #{tpu_custom_call.1} parent=23 // pred_fallthru
          _
        // Predicated region
        $region49: #{tpu_custom_call.1} parent=23 // pred_check
          %p562 = pneg %p221
        $region50: #{tpu_custom_call.1} parent=23 // pred_check_branch
          %564 = sbr.rel (%p562) target = $region52
        $region51: #{tpu_custom_call.1} parent=23 // pred_region
          %p565 = scmp.lt.s32.totalorder %s41, 1
          %s566 = scalar_select %p565, %s41, 1
          %s567 = scalar_lea.vmem %s6, %s566
        $region52: #{tpu_custom_call.1} parent=23 // pred_fallthru
          _
        // Predicated region
        $region53: #{tpu_custom_call.1} parent=23 // pred_check
          %p568 = pneg %p247
        $region54: #{tpu_custom_call.1} parent=23 // pred_check_branch
          %570 = sbr.rel (%p568) target = $region56
        $region55: #{tpu_custom_call.1} parent=23 // pred_region
          %p571 = scmp.lt.s32.totalorder %s41, 1
          %s572 = scalar_select %p571, %s41, 1
          %s573 = smul.addr %s572, 4
          %s574 = smul.addr %s573, 4
          %s575 = scalar_lea.vmem %s7, %s574
        $region56: #{tpu_custom_call.1} parent=23 // pred_fallthru
          _
        // Predicated region
        $region57: #{tpu_custom_call.1} parent=23 // pred_check
          %p576 = pneg %p273
        $region58: #{tpu_custom_call.1} parent=23 // pred_check_branch
          %578 = sbr.rel (%p576) target = $region60
        $region59: #{tpu_custom_call.1} parent=23 // pred_region
          %p579 = scmp.lt.s32.totalorder %s41, 1
          %s580 = scalar_select %p579, %s41, 1
          %s581 = scalar_lea.vmem %s8, %s580
        $region60: #{tpu_custom_call.1} parent=23 // pred_fallthru
          _
        // Predicated region
        $region61: #{tpu_custom_call.1} parent=23 // pred_check
          %p582 = pneg %p299
        $region62: #{tpu_custom_call.1} parent=23 // pred_check_branch
          %584 = sbr.rel (%p582) target = $region64
        $region63: #{tpu_custom_call.1} parent=23 // pred_region
          %p585 = scmp.lt.s32.totalorder %s41, 1
          %s586 = scalar_select %p585, %s41, 1
          %s587 = smul.addr %s586, 8
          %s588 = smul.addr %s587, 4
          %s589 = scalar_lea.vmem %s9, %s588
        $region64: #{tpu_custom_call.1} parent=23 // pred_fallthru
          _
        // Predicated region
        $region65: #{tpu_custom_call.1} parent=23 // pred_check
          %p590 = pneg %p325
        $region66: #{tpu_custom_call.1} parent=23 // pred_check_branch
          %592 = sbr.rel (%p590) target = $region68
        $region67: #{tpu_custom_call.1} parent=23 // pred_region
          %p593 = scmp.lt.s32.totalorder %s41, 1
          %s594 = scalar_select %p593, %s41, 1
          %s595 = scalar_lea.vmem %s10, %s594
        $region68: #{tpu_custom_call.1} parent=23 // pred_fallthru
          _
        // Predicated region
        $region69: #{tpu_custom_call.1} parent=23 // pred_check
          %p596 = pneg %p351
        $region70: #{tpu_custom_call.1} parent=23 // pred_check_branch
          %598 = sbr.rel (%p596) target = $region72
        $region71: #{tpu_custom_call.1} parent=23 // pred_region
          %s599 = sand.u32 %s33, 1
          %s600 = scalar_lea.sflag [#allocation10], %s599
          %s601 = sand.u32 %s341, 1
          %s602 = scalar_lea.vmem [#allocation9], %s601
          %604 = vsyncadd %s600, 0
          %s605 = scalar_lea.hbm %s11, %s41
          %s607 = sshll.u32 %s605, 4
          %s608 = int_to_ptr.hbm [resolvable:$true] %s607
          %s609 = sshll.u32 %s602, 4
          %s610 = int_to_ptr.vmem [resolvable:$true] %s609
          %612 = dma.hbm_to_vmem [thread:$0]  %s608, 16, %s610, %s600
        $region72: #{tpu_custom_call.1} parent=23 // pred_fallthru
          _
        // Predicated region
        $region73: #{tpu_custom_call.1} parent=23 // pred_check
          %p613 = pneg %p377
        $region74: #{tpu_custom_call.1} parent=23 // pred_check_branch
          %615 = sbr.rel (%p613) target = $region76
        $region75: #{tpu_custom_call.1} parent=23 // pred_region
          %p616 = scmp.lt.s32.totalorder %s41, 1
          %s617 = scalar_select %p616, %s41, 1
          %s618 = scalar_lea.vmem %s12, %s617
        $region76: #{tpu_custom_call.1} parent=23 // pred_fallthru
          _
      $region24: #{tpu_custom_call.1} parent=5 // pred_fallthru
        _
      %p619 = scmp.le.s32.totalorder 1, %s33
      %p620 = scmp.lt.s32.totalorder %s33, 5
      %p621 = pnand %p619, %p620
      %p622 = pneg %p621
      // Predicated region
      $region77: #{tpu_custom_call.1} parent=5 // pred_check
        _
      $region78: #{tpu_custom_call.1} parent=5 // pred_check_branch
        %624 = sbr.rel (%p621) target = $region80
      $region79: #{tpu_custom_call.1} parent=5 // pred_region
        %s625 = ssub.s32 %s33, 1
        %s626 = sand.u32 %s58, 1
        %s627 = scalar_lea.sflag [#allocation4], %s626
        %s628 = sand.u32 %s58, 1
        %s629 = smul.addr %s628, 8
        %s630 = scalar_lea.vmem [#allocation3], %s629
        // Predicated region
        $region81: #{tpu_custom_call.1} parent=79 // pred_check
          %p631 = pneg %p71
        $region82: #{tpu_custom_call.1} parent=79 // pred_check_branch
          %633 = sbr.rel (%p631) target = $region84
        $region83: #{tpu_custom_call.1} parent=79 // pred_region
          %635 = dma.done %s627, 128
        $region84: #{tpu_custom_call.1} parent=79 // pred_fallthru
          _
        %s636 = sand.u32 %s38, 1
        %s637 = scalar_lea.sflag [#allocation7], %s636
        %s638 = sand.u32 %s110, 1
        %s639 = scalar_lea.vmem [#allocation6], %s638
        // Predicated region
        $region85: #{tpu_custom_call.1} parent=79 // pred_check
          %p640 = pneg %p123
        $region86: #{tpu_custom_call.1} parent=79 // pred_check_branch
          %642 = sbr.rel (%p640) target = $region88
        $region87: #{tpu_custom_call.1} parent=79 // pred_region
          %644 = dma.done %s637, 16
        $region88: #{tpu_custom_call.1} parent=79 // pred_fallthru
          _
        %s645 = sand.u32 %s38, 1
        %s646 = scalar_lea.sflag [#allocation7], %s645
        %s647 = sand.u32 %s188, 1
        %s648 = scalar_lea.vmem [#allocation8], %s647
        // Predicated region
        $region89: #{tpu_custom_call.1} parent=79 // pred_check
          %p649 = pneg %p201
        $region90: #{tpu_custom_call.1} parent=79 // pred_check_branch
          %651 = sbr.rel (%p649) target = $region92
        $region91: #{tpu_custom_call.1} parent=79 // pred_region
          %653 = dma.done %s646, 16
        $region92: #{tpu_custom_call.1} parent=79 // pred_fallthru
          _
        %s654 = sand.u32 %s38, 1
        %s655 = scalar_lea.sflag [#allocation10], %s654
        %s656 = sand.u32 %s344, 1
        %s657 = scalar_lea.vmem [#allocation9], %s656
        // Predicated region
        $region93: #{tpu_custom_call.1} parent=79 // pred_check
          %p658 = pneg %p357
        $region94: #{tpu_custom_call.1} parent=79 // pred_check_branch
          %660 = sbr.rel (%p658) target = $region96
        $region95: #{tpu_custom_call.1} parent=79 // pred_region
          %662 = dma.done %s655, 16
        $region96: #{tpu_custom_call.1} parent=79 // pred_fallthru
          _
        // Predicated region
        $region97: #{tpu_custom_call.1} parent=79 // pred_check
          %p663 = pneg %p404
        $region98: #{tpu_custom_call.1} parent=79 // pred_check_branch
          %665 = sbr.rel (%p663) target = $region100
        $region99: #{tpu_custom_call.1} parent=79 // pred_region
          %667 = dma.done [#allocation10], 256
        $region100: #{tpu_custom_call.1} parent=79 // pred_fallthru
          _
        %s668 = sand.u32 %s58, 1
        %s669 = scalar_lea.sflag [#allocation4], %s668
        %s670 = sand.u32 %s58, 1
        %s671 = smul.addr %s670, 8
        %s672 = scalar_lea.vmem [#allocation3], %s671
        %p673 = pneg %p71
        %p674 = pneg %p68
        %p675 = scmp.lt.s32.totalorder %s43, 1
        %s676 = scalar_select %p675, %s43, 1
        %s677 = smul.addr %s676, 4
        %s678 = smul.addr %s677, 4
        %s679 = scalar_lea.vmem %s1, %s678
        %p680 = pneg %p97
        %p681 = pneg %p94
        %s682 = sand.u32 %s38, 1
        %s683 = scalar_lea.sflag [#allocation7], %s682
        %s684 = sand.u32 %s110, 1
        %s685 = scalar_lea.vmem [#allocation6], %s684
        %p686 = pneg %p123
        %p687 = pneg %p120
        %p688 = scmp.lt.s32.totalorder %s43, 1
        %s689 = scalar_select %p688, %s43, 1
        %s690 = smul.addr %s689, 4
        %s691 = smul.addr %s690, 4
        %s692 = scalar_lea.vmem %s3, %s691
        %p693 = pneg %p149
        %p694 = pneg %p146
        %p695 = scmp.lt.s32.totalorder %s43, 1
        %s696 = scalar_select %p695, %s43, 1
        %s697 = scalar_lea.vmem %s4, %s696
        %p698 = pneg %p175
        %p699 = pneg %p172
        %s700 = sand.u32 %s38, 1
        %s701 = scalar_lea.sflag [#allocation7], %s700
        %s702 = sand.u32 %s188, 1
        %s703 = scalar_lea.vmem [#allocation8], %s702
        %p704 = pneg %p201
        %p705 = pneg %p198
        %p706 = scmp.lt.s32.totalorder %s43, 1
        %s707 = scalar_select %p706, %s43, 1
        %s708 = scalar_lea.vmem %s6, %s707
        %p709 = pneg %p227
        %p710 = pneg %p224
        %p711 = scmp.lt.s32.totalorder %s43, 1
        %s712 = scalar_select %p711, %s43, 1
        %s713 = smul.addr %s712, 4
        %s714 = smul.addr %s713, 4
        %s715 = scalar_lea.vmem %s7, %s714
        %p716 = pneg %p253
        %p717 = pneg %p250
        %p718 = scmp.lt.s32.totalorder %s43, 1
        %s719 = scalar_select %p718, %s43, 1
        %s720 = scalar_lea.vmem %s8, %s719
        %p721 = pneg %p279
        %p722 = pneg %p276
        %p723 = scmp.lt.s32.totalorder %s43, 1
        %s724 = scalar_select %p723, %s43, 1
        %s725 = smul.addr %s724, 8
        %s726 = smul.addr %s725, 4
        %s727 = scalar_lea.vmem %s9, %s726
        %p728 = pneg %p305
        %p729 = pneg %p302
        %p730 = scmp.lt.s32.totalorder %s43, 1
        %s731 = scalar_select %p730, %s43, 1
        %s732 = scalar_lea.vmem %s10, %s731
        %p733 = pneg %p331
        %p734 = pneg %p328
        %s735 = sand.u32 %s38, 1
        %s736 = scalar_lea.sflag [#allocation10], %s735
        %s737 = sand.u32 %s344, 1
        %s738 = scalar_lea.vmem [#allocation9], %s737
        %p739 = pneg %p357
        %p740 = pneg %p354
        %p741 = scmp.lt.s32.totalorder %s43, 1
        %s742 = scalar_select %p741, %s43, 1
        %s743 = scalar_lea.vmem %s12, %s742
        %p744 = pneg %p383
        %p745 = pneg %p380
        %p746 = pneg %p404
        %p747 = pneg %p401
        %p748 = pneg %p425
        %p749 = pneg %p422
        %p750 = pneg %p451
        %p751 = pneg %p448
        %s752 = sand.u32 %s438, 1
        %s753 = scalar_lea.sflag [#allocation5], %s752
        %s754 = sand.u32 %s438, 1
        %s755 = smul.addr %s754, 8
        %s756 = scalar_lea.vmem [#allocation12], %s755
        %p757 = scmp.lt.s32.totalorder %s43, 1
        %s758 = scalar_select %p757, %s43, 1
        %s759 = smul.addr %s758, 4
        %s760 = smul.addr %s759, 4
        %s761 = scalar_lea.vmem %s1, %s760
        %p762 = scmp.lt.s32.totalorder %s43, 1
        %s763 = scalar_select %p762, %s43, 1
        %s764 = smul.addr %s763, 4
        %s765 = smul.addr %s764, 4
        %s766 = scalar_lea.vmem %s3, %s765
        %p767 = scmp.lt.s32.totalorder %s43, 1
        %s768 = scalar_select %p767, %s43, 1
        %s769 = scalar_lea.vmem %s4, %s768
        %p770 = scmp.lt.s32.totalorder %s43, 1
        %s771 = scalar_select %p770, %s43, 1
        %s772 = scalar_lea.vmem %s6, %s771
        %p773 = scmp.lt.s32.totalorder %s43, 1
        %s774 = scalar_select %p773, %s43, 1
        %s775 = smul.addr %s774, 4
        %s776 = smul.addr %s775, 4
        %s777 = scalar_lea.vmem %s7, %s776
        %p778 = scmp.lt.s32.totalorder %s43, 1
        %s779 = scalar_select %p778, %s43, 1
        %s780 = scalar_lea.vmem %s8, %s779
        %p781 = scmp.lt.s32.totalorder %s43, 1
        %s782 = scalar_select %p781, %s43, 1
        %s783 = smul.addr %s782, 8
        %s784 = smul.addr %s783, 4
        %s785 = scalar_lea.vmem %s9, %s784
        %p786 = scmp.lt.s32.totalorder %s43, 1
        %s787 = scalar_select %p786, %s43, 1
        %s788 = scalar_lea.vmem %s10, %s787
        %p789 = scmp.lt.s32.totalorder %s43, 1
        %s790 = scalar_select %p789, %s43, 1
        %s791 = scalar_lea.vmem %s12, %s790
        %p793 = scmp.eq.s32.totalorder %s43, 0
        // Predicated region
        $region101: #{tpu_custom_call.1} parent=79 // pred_check
          %p794 = pneg %p793
        $region102: #{tpu_custom_call.1} parent=79 // pred_check_branch
          %796 = sbr.rel (%p794) target = $region104
        $region103: #{tpu_custom_call.1} parent=79 // pred_region
          %v797 = vld [vmem:[%s630] sm:$0xff]
          %vm798 = vcmask 261120
          %799 = vst.msk [vmem:[#allocation2] sm:$0xff] %vm798, %v797
        $region104: #{tpu_custom_call.1} parent=79 // pred_fallthru
          _
        %v800 = vld [vmem:[#allocation2] sm:$0xff]
        %v801 = vpack.c.bf16 %v800, %v800
        %v802 = vld [vmem:[%s761] sm:$0xf]
        %v803 = vld [vmem:[%s761 + $0x4] sm:$0xf]
        %v804 = vld [vmem:[%s761 + $0x8] sm:$0xf]
        %v805 = vld [vmem:[%s761 + $0xc] sm:$0xf]
        %v806 = vld [vmem:[%s639] sm:$0x1]
        %v808 = vperm.slane %v806, 0
        %v814 = vunpack.c.l.b16 %v802
        %v815 = vunpack.c.l.b16 %v803
        %v816 = vunpack.c.l.b16 %v804
        %v817 = vunpack.c.l.b16 %v805
        %v818 = vpack.c.b16 %v815, %v814
        %v819 = vpack.c.b16 %v817, %v816
        %vm822 = vcmask 261120
        %v824 = vsel %vm822, %v801, 0
        %826 = vmatpush.bf16.msra.mxu0 0
        %827 = vmatpush.bf16.msra.mxu0 0
        %828 = vmatpush.bf16.msra.mxu0 0
        %829 = vmatpush.bf16.msra.mxu0 0
        %830 = vmatpush.bf16.msra.mxu0 0
        %831 = vmatpush.bf16.msra.mxu0 0
        %832 = vmatpush.bf16.msra.mxu0 %v819
        %833 = vmatpush.bf16.msra.mxu0 %v818
        %834 = vmatmul.bf16.gmra.mxu0 %v824
        %v835 = vpop.f32.mrf.mxu0
        %v836 = vadd.f32 %v808, %v835
        %v837 = vpop.f32.mrf.mxu0
        %838 = vdwg.mxu0
        %v839 = vpack.c.bf16 %v836, %v836
        %v840 = vld [vmem:[%s766] sm:$0xf]
        %v841 = vld [vmem:[%s766 + $0x4] sm:$0xf]
        %v842 = vld [vmem:[%s766 + $0x8] sm:$0xf]
        %v843 = vld [vmem:[%s766 + $0xc] sm:$0xf]
        %v844 = vld [vmem:[%s769] sm:$0x1]
        %v846 = vperm.slane %v844, 0
        %v852 = vunpack.c.l.b16 %v840
        %v853 = vunpack.c.l.b16 %v841
        %v854 = vunpack.c.l.b16 %v842
        %v855 = vunpack.c.l.b16 %v843
        %v856 = vpack.c.b16 %v853, %v852
        %v857 = vpack.c.b16 %v855, %v854
        %v861 = vsel %vm822, %v839, 0
        %863 = vmatpush.bf16.msra.mxu0 0
        %864 = vmatpush.bf16.msra.mxu0 0
        %865 = vmatpush.bf16.msra.mxu0 0
        %866 = vmatpush.bf16.msra.mxu0 0
        %867 = vmatpush.bf16.msra.mxu0 0
        %868 = vmatpush.bf16.msra.mxu0 0
        %869 = vmatpush.bf16.msra.mxu0 %v857
        %870 = vmatpush.bf16.msra.mxu0 %v856
        %871 = vmatmul.bf16.gmra.mxu0 %v861
        %v872 = vpop.f32.mrf.mxu0
        %v873 = vadd.f32 %v846, %v872
        %v874 = vpop.f32.mrf.mxu0
        %875 = vdwg.mxu0
        %v876 = vadd.f32 %v800, %v873
        %v877 = vld [vmem:[%s648] sm:$0x1]
        %v878 = vld [vmem:[%s772] sm:$0x1]
        %v879 = vsel %vm822, %v876, 0.0
        %880 = vadd.xlane.f32.xlu0 %v879
        %v881 = vpop.xlane.xlu0 %880
        %v882 = vrcp.pop 32.0
        %v883 = vmul.f32 32.0, %v882
        %v884 = vsub.f32 1.0, %v883
        %v885 = vmul.f32 %v882, %v884
        %v886 = vadd.f32 %v882, %v885
        %vm887 = vweird.f32 %v882
        %v888 = vsel %vm887, %v882, %v886
        %v889 = vmul.f32 %v881, %v888
        %v890 = vsub.f32 %v876, %v889
        %v891 = vmul.f32 %v890, %v890
        %v892 = vsel %vm822, %v891, 0.0
        %893 = vadd.xlane.f32.xlu0 %v892
        %v894 = vpop.xlane.xlu0 %893
        %v895 = vmul.f32 %v894, %v888
        %v896 = vadd.f32 %v895, 1e-05
        %v897 = vrsqrt.pop %v896
        %v898 = vmul.f32 %v897, %v896
        %v899 = vmul.f32 %v898, %v897
        %v900 = vmul.f32 0.5, %v899
        %v901 = vsub.f32 1.5, %v900
        %v902 = vmul.f32 %v897, %v901
        %vm903 = vweird.f32 %v896
        %vm904 = vweird.f32 %v897
        %vm905 = vmor %vm903, %vm904
        %v906 = vsel %vm905, %v897, %v902
        %v907 = vmul.f32 %v890, %v906
        %v909 = vperm.slane %v877, 0
        %v911 = vmul.f32 %v907, %v909
        %v913 = vperm.slane %v878, 0
        %v915 = vadd.f32 %v911, %v913
        %v916 = vpack.c.bf16 %v915, %v915
        %v917 = vld [vmem:[%s777] sm:$0xf]
        %v918 = vld [vmem:[%s777 + $0x4] sm:$0xf]
        %v919 = vld [vmem:[%s777 + $0x8] sm:$0xf]
        %v920 = vld [vmem:[%s777 + $0xc] sm:$0xf]
        %v921 = vld [vmem:[%s780] sm:$0x1]
        %v923 = vperm.slane %v921, 0
        %v929 = vunpack.c.l.b16 %v917
        %v930 = vunpack.c.l.b16 %v918
        %v931 = vunpack.c.l.b16 %v919
        %v932 = vunpack.c.l.b16 %v920
        %v933 = vpack.c.b16 %v930, %v929
        %v934 = vpack.c.b16 %v932, %v931
        %v938 = vsel %vm822, %v916, 0
        %940 = vmatpush.bf16.msra.mxu0 0
        %941 = vmatpush.bf16.msra.mxu0 0
        %942 = vmatpush.bf16.msra.mxu0 0
        %943 = vmatpush.bf16.msra.mxu0 0
        %944 = vmatpush.bf16.msra.mxu0 0
        %945 = vmatpush.bf16.msra.mxu0 0
        %946 = vmatpush.bf16.msra.mxu0 %v934
        %947 = vmatpush.bf16.msra.mxu0 %v933
        %948 = vmatmul.bf16.gmra.mxu0 %v938
        %v949 = vpop.f32.mrf.mxu0
        %v950 = vadd.f32 %v923, %v949
        %v951 = vpop.f32.mrf.mxu0
        %952 = vdwg.mxu0
        %v953 = vmax.f32 %v950, 0.0
        %v954 = vpack.c.bf16 %v953, %v953
        %v955 = vld [vmem:[%s785] sm:$0xf]
        %v956 = vld [vmem:[%s785 + $0x4] sm:$0xf]
        %v957 = vld [vmem:[%s785 + $0x8] sm:$0xf]
        %v958 = vld [vmem:[%s785 + $0xc] sm:$0xf]
        %v959 = vld [vmem:[%s785 + $0x10] sm:$0xf]
        %v960 = vld [vmem:[%s785 + $0x14] sm:$0xf]
        %v961 = vld [vmem:[%s785 + $0x18] sm:$0xf]
        %v962 = vld [vmem:[%s785 + $0x1c] sm:$0xf]
        %v963 = vld [vmem:[%s788] sm:$0x1]
        %v965 = vperm.slane %v963, 0
        %v975 = vunpack.c.l.b16 %v955
        %v976 = vunpack.c.l.b16 %v956
        %v977 = vunpack.c.l.b16 %v957
        %v978 = vunpack.c.l.b16 %v958
        %v979 = vunpack.c.l.b16 %v959
        %v980 = vunpack.c.l.b16 %v960
        %v981 = vunpack.c.l.b16 %v961
        %v982 = vunpack.c.l.b16 %v962
        %v983 = vpack.c.b16 %v976, %v975
        %v984 = vpack.c.b16 %v978, %v977
        %v985 = vpack.c.b16 %v980, %v979
        %v986 = vpack.c.b16 %v982, %v981
        %vm991 = vcmask 523264
        %v993 = vsel %vm991, %v954, 0
        %995 = vmatpush.bf16.msra.mxu0 0
        %996 = vmatpush.bf16.msra.mxu0 0
        %997 = vmatpush.bf16.msra.mxu0 0
        %998 = vmatpush.bf16.msra.mxu0 0
        %999 = vmatpush.bf16.msra.mxu0 %v986
        %1000 = vmatpush.bf16.msra.mxu0 %v985
        %1001 = vmatpush.bf16.msra.mxu0 %v984
        %1002 = vmatpush.bf16.msra.mxu0 %v983
        %1003 = vmatmul.bf16.gmra.mxu0 %v993
        %v1004 = vpop.f32.mrf.mxu0
        %v1005 = vadd.f32 %v965, %v1004
        %v1006 = vpop.f32.mrf.mxu0
        %1007 = vdwg.mxu0
        %v1008 = vadd.f32 %v915, %v1005
        %v1009 = vld [vmem:[%s657] sm:$0x1]
        %v1010 = vld [vmem:[%s791] sm:$0x1]
        %v1011 = vsel %vm822, %v1008, 0.0
        %1012 = vadd.xlane.f32.xlu0 %v1011
        %v1013 = vpop.xlane.xlu0 %1012
        %v1014 = vmul.f32 %v1013, %v888
        %v1015 = vsub.f32 %v1008, %v1014
        %v1016 = vmul.f32 %v1015, %v1015
        %v1017 = vsel %vm822, %v1016, 0.0
        %1018 = vadd.xlane.f32.xlu0 %v1017
        %v1019 = vpop.xlane.xlu0 %1018
        %v1020 = vmul.f32 %v1019, %v888
        %v1021 = vadd.f32 %v1020, 1e-05
        %v1022 = vrsqrt.pop %v1021
        %v1023 = vmul.f32 %v1022, %v1021
        %v1024 = vmul.f32 %v1023, %v1022
        %v1025 = vmul.f32 0.5, %v1024
        %v1026 = vsub.f32 1.5, %v1025
        %v1027 = vmul.f32 %v1022, %v1026
        %vm1028 = vweird.f32 %v1021
        %vm1029 = vweird.f32 %v1022
        %vm1030 = vmor %vm1028, %vm1029
        %v1031 = vsel %vm1030, %v1022, %v1027
        %v1032 = vmul.f32 %v1015, %v1031
        %v1034 = vperm.slane %v1009, 0
        %v1036 = vmul.f32 %v1032, %v1034
        %v1038 = vperm.slane %v1010, 0
        %v1040 = vadd.f32 %v1036, %v1038
        %1041 = vst.msk [vmem:[#allocation2] sm:$0xff] %vm822, %v1040
        %p1042 = scmp.eq.s32.totalorder %s43, 1
        // Predicated region
        $region105: #{tpu_custom_call.1} parent=79 // pred_check
          %p1043 = pneg %p1042
        $region106: #{tpu_custom_call.1} parent=79 // pred_check_branch
          %1045 = sbr.rel (%p1043) target = $region108
        $region107: #{tpu_custom_call.1} parent=79 // pred_region
          %v1046 = vpack.c.bf16 %v1040, %v1040
          %v1047 = vld [vmem:[#allocation11] sm:$0xf]
          %v1048 = vld [vmem:[#allocation11 + $0x4] sm:$0xf]
          %v1049 = vld [vmem:[#allocation11 + $0x8] sm:$0xf]
          %v1050 = vld [vmem:[#allocation11 + $0xc] sm:$0xf]
          %v1051 = vld [vmem:[%s14] sm:$0x1]
          %v1053 = vperm.slane %v1051, 0
          %v1059 = vunpack.c.l.b16 %v1047
          %v1060 = vunpack.c.l.b16 %v1048
          %v1061 = vunpack.c.l.b16 %v1049
          %v1062 = vunpack.c.l.b16 %v1050
          %v1063 = vpack.c.b16 %v1060, %v1059
          %v1064 = vpack.c.b16 %v1062, %v1061
          %v1068 = vsel %vm822, %v1046, 0
          %1070 = vmatpush.bf16.msra.mxu0 0
          %1071 = vmatpush.bf16.msra.mxu0 0
          %1072 = vmatpush.bf16.msra.mxu0 0
          %1073 = vmatpush.bf16.msra.mxu0 0
          %1074 = vmatpush.bf16.msra.mxu0 0
          %1075 = vmatpush.bf16.msra.mxu0 0
          %1076 = vmatpush.bf16.msra.mxu0 %v1064
          %1077 = vmatpush.bf16.msra.mxu0 %v1063
          %1078 = vmatmul.bf16.gmra.mxu0 %v1068
          %v1079 = vpop.f32.mrf.mxu0
          %v1080 = vadd.f32 %v1053, %v1079
          %v1081 = vpop.f32.mrf.mxu0
          %1082 = vdwg.mxu0
          %1083 = vst [vmem:[%s756] sm:$0xff] %v1080
        $region108: #{tpu_custom_call.1} parent=79 // pred_fallthru
          _
        %s1084 = sand.u32 %s438, 1
        %s1085 = scalar_lea.sflag [#allocation5], %s1084
        %s1086 = sand.u32 %s438, 1
        %s1087 = smul.addr %s1086, 8
        %s1088 = scalar_lea.vmem [#allocation12], %s1087
        // Predicated region
        $region109: #{tpu_custom_call.1} parent=79 // pred_check
          %p1089 = pneg %p448
        $region110: #{tpu_custom_call.1} parent=79 // pred_check_branch
          %1091 = sbr.rel (%p1089) target = $region112
        $region111: #{tpu_custom_call.1} parent=79 // pred_region
          %1093 = vsyncadd %s1085, 0
          %s1094 = smul.addr %s42, 8
          %s1095 = scalar_lea.hbm %s15, %s1094
          %s1097 = sshll.u32 %s1088, 4
          %s1098 = int_to_ptr.vmem [resolvable:$true] %s1097
          %s1099 = sshll.u32 %s1095, 4
          %s1100 = int_to_ptr.hbm [resolvable:$true] %s1099
          %1102 = dma.vmem_to_hbm [thread:$0]  %s1098, 128, %s1100, %s1085
        $region112: #{tpu_custom_call.1} parent=79 // pred_fallthru
          _
      $region80: #{tpu_custom_call.1} parent=5 // pred_fallthru
        _
      %p1103 = scmp.le.s32.totalorder 2, %s33
      // Predicated region
      $region113: #{tpu_custom_call.1} parent=5 // pred_check
        %p1104 = pneg %p1103
      $region114: #{tpu_custom_call.1} parent=5 // pred_check_branch
        %1106 = sbr.rel (%p1104) target = $region116
      $region115: #{tpu_custom_call.1} parent=5 // pred_region
        %s1107 = ssub.s32 %s33, 2
        // Predicated region
        $region117: #{tpu_custom_call.1} parent=115 // pred_check
          %p1108 = pneg %p454
        $region118: #{tpu_custom_call.1} parent=115 // pred_check_branch
          %1110 = sbr.rel (%p1108) target = $region120
        $region119: #{tpu_custom_call.1} parent=115 // pred_region
          %s1111 = sand.u32 %s439, 1
          %s1112 = scalar_lea.sflag [#allocation5], %s1111
          %s1113 = sand.u32 %s439, 1
          %s1114 = smul.addr %s1113, 8
          %s1115 = scalar_lea.vmem [#allocation12], %s1114
          %1117 = dma.done %s1112, 128
        $region120: #{tpu_custom_call.1} parent=115 // pred_fallthru
          _
      $region116: #{tpu_custom_call.1} parent=5 // pred_fallthru
        _
    $region6: #{tpu_custom_call.1} parent=1 // loop_footer
      %s37 = sadd.s32 1, %s33
    $region7: #{tpu_custom_call.1} parent=1 // loop_footer_branch
      %32 = sbr.rel target = $region3
    $region8: #{tpu_custom_call.1} parent=1 // loop_exit
      _
    %1118 = vsyncpa [#allocation4], 1
    %s1119 = scalar_lea.sflag [#allocation4], 1
    %1120 = vsyncpa %s1119, 1
    %1121 = vsyncpa [#allocation7], 1
    %s1122 = scalar_lea.sflag [#allocation7], 1
    %1123 = vsyncpa %s1122, 1
    %1124 = vsyncpa [#allocation10], 1
    %s1125 = scalar_lea.sflag [#allocation10], 1
    %1126 = vsyncpa %s1125, 1
    %1127 = vsyncpa [#allocation5], 1
    %s1128 = scalar_lea.sflag [#allocation5], 1
    %1129 = vsyncpa %s1128, 1

</llo_original>
